<compile_context>
chip_gen: v7x
topology: tpu7x:2x2x1
jax: 0.10.0
libtpu: 0.0.40
codegen_flags: <defaults>
</compile_context>

<pallas_src>
import numpy as np
import jax
import jax.numpy as jnp
from jax.experimental import pallas as pl
from jax.experimental.pallas import tpu as pltpu

# ---- static geometry (the module applied to 16x16 NCHW inputs) --------------
CIN = 3                               # input channels
C = 5                                 # conv1/conv2/fc1 output channels
H = W = 16                            # conv1/conv2 activation spatial size
PAD = 1
HP, WP = H + 2 * PAD, W + 2 * PAD     # 18 x 18 padded planes
FLAT = HP * WP                        # 324 flattened padded plane (lane axis)
K3, K5 = 3, 5
HO = H - K5 + 1                       # 12 = fc1 output spatial size
SHIFT = PAD * WP + PAD                # 19: flat offset of output (0,0) in a padded plane
TAIL = 128                            # lane tail so every shifted slice stays in bounds
ROWS1 = 1 + CIN * K3 * K3             # 28  im2col rows (row 0 = ones row for folded bias)
ROWS2 = 1 + C * K3 * K3               # 46
ROWS3 = 1 + C * K5 * K5               # 126

assert TAIL >= SHIFT + (K5 - 1) * (WP + 1)   # max slice offset used (95) fits the tail


def _res50_fused_kernel(xp_ref, w1_ref, w2_ref, w3_ref, mask_ref, o_ref,
                        im_ref, p2_ref, p3_ref):
    """Whole Res50 forward for NB images packed along the lane axis.

    xp_ref  : (CIN, WS)     f32   zero-padded, lane-flattened inputs (+TAIL zeros)
    w*_ref  : (C, ROWS*)    bf16  packed weights, column 0 = bias
    mask_ref: (1, WIDTH)    f32   1.0 on valid conv1/conv2 output columns
    o_ref   : (C, WIDTH)    f32   fc1 result slab (cropped/reshaped in wrapper)
    im_ref  : (ROWS3,WIDTH) f32   shared im2col scratch (row 0 = ones)
    p2_ref  : (C, WS)       f32   padded conv1 output plane
    p3_ref  : (C, WS)       f32   padded conv2 output plane
    WIDTH = NB*FLAT, WS = WIDTH + TAIL.
    """
    f32, bf16 = jnp.float32, jnp.bfloat16
    width = o_ref.shape[-1]

    # Row 0 of the im2col buffer is a constant ones row: it folds the bias into
    # the single per-layer matmul (bias lives in column 0 of the packed weights).
    im_ref[0:1, :] = jnp.ones((1, width), f32)

    def build_im2col(src_ref, cin, k, base):
        # im2col row (1 + t*cin + ci) = src[ci, base + dy*WP + dx : ... + width]
        for t in range(k * k):
            off = base + (t // k) * WP + (t % k)
            im_ref[1 + t * cin:1 + (t + 1) * cin, :] = src_ref[:, off:off + width]

    def layer_matmul(w_ref):
        rows = w_ref.shape[1]
        lhs = w_ref[...]                                  # (C, rows) bf16
        rhs = im_ref[:rows, :].astype(bf16)               # (rows, width) bf16
        return jnp.dot(lhs, rhs, preferred_element_type=f32)   # single MXU pass

    def store_padded_plane(dst_ref, val):
        # Zero the 19-lane left halo (top padding row + first pad column), then
        # one wide store of the masked result at lane offset SHIFT; the result
        # becomes the next layer's zero-padded plane (all other padding columns
        # receive masked zeros from invalid output positions).
        dst_ref[:, :SHIFT] = jnp.zeros((dst_ref.shape[0], SHIFT), dst_ref.dtype)
        dst_ref[:, SHIFT:SHIFT + width] = val

    valid = mask_ref[...] != 0.0   # NaN-safe select (scratch tails may be garbage)

    # conv1 (3->5, k3, pad1) + ReLU
    build_im2col(xp_ref, CIN, K3, 0)
    a1 = jnp.where(valid, jnp.maximum(layer_matmul(w1_ref), 0.0), 0.0)
    store_padded_plane(p2_ref, a1)

    # conv2 (5->5, k3, pad1) + ReLU
    build_im2col(p2_ref, C, K3, 0)
    a2 = jnp.where(valid, jnp.maximum(layer_matmul(w2_ref), 0.0), 0.0)
    store_padded_plane(p3_ref, a2)

    # fc1 (5->5, k5, pad0), no activation.  base=SHIFT because p3 is stored
    # padded; invalid columns hold garbage but are cropped away in the wrapper.
    build_im2col(p3_ref, C, K5, SHIFT)
    o_ref[...] = layer_matmul(w3_ref).astype(o_ref.dtype)


def _pack_wb(w, b):
    # OIHW + bias -> (cout, 1 + kh*kw*cin) bf16, column 0 = bias,
    # column 1 + (dy*kw+dx)*cin + ci = w[co, ci, dy, dx]  (matches im2col rows).
    cout, cin, kh, kw = w.shape
    wt = jnp.transpose(w, (2, 3, 1, 0)).reshape(kh * kw * cin, cout)
    packed = jnp.concatenate([b.reshape(1, cout).astype(w.dtype), wt], axis=0)
    return packed.T.astype(jnp.bfloat16)


def _make_mask(nb):
    # Valid conv1/conv2 output columns of the flattened padded plane, per image.
    loc = np.arange(FLAT)
    m = ((loc // WP) < H) & ((loc % WP) < W)
    return np.tile(m, nb).astype(np.float32)[None, :]     # (1, nb*FLAT)


@jax.jit
def res50_forward(params, x):
    """x: (N, 3, 16, 16) float32 NCHW -> (N, 5, 12, 12)."""
    n = x.shape[0]
    assert x.shape[1:] == (CIN, H, W), x.shape
    f32 = jnp.float32

    # 2 grid steps when possible so both v7x TensorCores get work.
    G = 2 if (n >= 2 and n % 2 == 0) else 1
    NB = n // G
    width = NB * FLAT
    ws = width + TAIL

    w1 = _pack_wb(params["conv1_w"], params["conv1_b"])   # (5, 28)
    w2 = _pack_wb(params["conv2_w"], params["conv2_b"])   # (5, 46)
    w3 = _pack_wb(params["fc1_w"], params["fc1_b"])       # (5, 126)
    mask = jnp.asarray(_make_mask(NB))

    # Wrapper-side zero padding + lane flattening (per grid step: (CIN, WS)).
    xp = jnp.pad(x.astype(f32), ((0, 0), (0, 0), (PAD, PAD), (PAD, PAD)))
    xp = xp.reshape(G, NB, CIN, HP, WP).transpose(0, 2, 1, 3, 4)
    xp = xp.reshape(G, CIN, width)
    xp = jnp.pad(xp, ((0, 0), (0, 0), (0, TAIL)))          # (G, CIN, WS)

    def fixed(shape):
        return pl.BlockSpec(shape, lambda i: (0,) * len(shape))

    cost = pl.CostEstimate(
        flops=2 * G * C * (ROWS1 + ROWS2 + ROWS3) * width,
        transcendentals=0,
        bytes_accessed=(xp.size * 4 + (w1.size + w2.size + w3.size) * 2
                        + mask.size * 4 + G * C * width * 4),
    )

    out = pl.pallas_call(
        _res50_fused_kernel,
        out_shape=jax.ShapeDtypeStruct((G, C, width), f32),
        grid=(G,),
        in_specs=[
            pl.BlockSpec((None, CIN, ws), lambda i: (i, 0, 0)),
            fixed(w1.shape), fixed(w2.shape), fixed(w3.shape),
            fixed(mask.shape),
        ],
        out_specs=pl.BlockSpec((None, C, width), lambda i: (i, 0, 0)),
        scratch_shapes=[
            pltpu.VMEM((ROWS3, width), f32),   # shared im2col buffer
            pltpu.VMEM((C, ws), f32),          # padded conv1 output plane
            pltpu.VMEM((C, ws), f32),          # padded conv2 output plane
        ],
        compiler_params=pltpu.CompilerParams(
            dimension_semantics=("parallel",)),
        cost_estimate=cost,
    )(xp, w1, w2, w3, mask)

    # Lane-dense kernel output -> (N, C, HO, HO) with plain XLA reshape/crop.
    y = out.reshape(G, C, NB, HP, WP).transpose(0, 2, 1, 3, 4)
    y = y.reshape(n, C, HP, WP)[:, :, :HO, :HO]
    return y.astype(x.dtype)


def init_params(key):
    """Deterministic synthetic parameters with the shapes of Res50.__init__."""
    ks = jax.random.split(key, 7)
    return {
        # conv1: convReLu(3, 5) -> Conv2d(3, 5, 3, 1, (1,1))
        "conv1_w": jax.random.normal(ks[0], (5, 3, 3, 3), jnp.float32) * 0.1,
        "conv1_b": jax.random.normal(ks[1], (5,), jnp.float32) * 0.1,
        # conv2: convReLu(5, 5) -> Conv2d(5, 5, 3, 1, (1,1))
        "conv2_w": jax.random.normal(ks[2], (5, 5, 3, 3), jnp.float32) * 0.1,
        "conv2_b": jax.random.normal(ks[3], (5,), jnp.float32) * 0.1,
        # fc1: Conv2d(5, 5, 5, 1, (0,0))
        "fc1_w": jax.random.normal(ks[4], (5, 5, 5, 5), jnp.float32) * 0.1,
        "fc1_b": jax.random.normal(ks[5], (5,), jnp.float32) * 0.1,
        # out: Linear(5, 2, bias=False) -- defined in __init__ but unused in forward.
        "out_w": jax.random.normal(ks[6], (2, 5), jnp.float32) * 0.1,
    }


def _conv_ref(x, w, b, pad):
    y = jax.lax.conv_general_dilated(
        x, w, window_strides=(1, 1), padding=[(pad, pad), (pad, pad)],
        dimension_numbers=("NCHW", "OIHW", "NCHW"),
        precision=jax.lax.Precision.HIGHEST)
    return y + b[None, :, None, None]


def res50_ref(params, x):
    x = jax.nn.relu(_conv_ref(x, params["conv1_w"], params["conv1_b"], 1))
    x = jax.nn.relu(_conv_ref(x, params["conv2_w"], params["conv2_b"], 1))
    x = _conv_ref(x, params["fc1_w"], params["fc1_b"], 0)
    return x


if __name__ == "__main__":
    key = jax.random.PRNGKey(0)
    pkey, xkey = jax.random.split(key)
    params = init_params(pkey)

    # N=2, C=3, H=W=16 -> output (2, 5, 12, 12)
    x = jax.random.normal(xkey, (2, CIN, H, W), jnp.float32)

    y = jax.block_until_ready(res50_forward(params, x))

    # Reference is full-f32 (HIGHEST) conv; kernel uses bf16 operands with f32
    # accumulation (single-pass MXU), so compare at 1e-2.
    y_ref = res50_ref(params, x)
    assert y.shape == (2, C, HO, HO), y.shape
    err = float(jnp.max(jnp.abs(y - y_ref)))
    assert jnp.allclose(y, y_ref, rtol=1e-2, atol=1e-2), err

    print("KERNEL_OK")
</pallas_src>

<mosaic_0001>
module attributes {stable_mosaic.version = 11 : i64} {
  func.func @_res50_fused_kernel(%arg0: i32, %arg1: memref<1x3x452xf32, #tpu.memory_space<vmem>>, %arg2: memref<5x28xbf16, #tpu.memory_space<vmem>>, %arg3: memref<5x46xbf16, #tpu.memory_space<vmem>>, %arg4: memref<5x126xbf16, #tpu.memory_space<vmem>>, %arg5: memref<1x324xf32, #tpu.memory_space<vmem>>, %arg6: memref<1x5x324xf32, #tpu.memory_space<vmem>>, %arg7: memref<126x324xf32, #tpu.memory_space<vmem>>, %arg8: memref<5x452xf32, #tpu.memory_space<vmem>>, %arg9: memref<5x452xf32, #tpu.memory_space<vmem>>) attributes {dimension_semantics = [#tpu.dimension_semantics<parallel>], iteration_bounds = array<i64: 2>, scalar_prefetch = 0 : i64, scratch_operands = 3 : i64, tpu.core_type = #tpu.core_type<tc>, window_params = [{transform_indices = @transform_0, window_bounds = array<i64: 1, 3, 452>}, {pipeline_mode = #tpu.pipeline_mode<synchronous>, transform_indices = @transform_1, window_bounds = array<i64: 5, 28>}, {pipeline_mode = #tpu.pipeline_mode<synchronous>, transform_indices = @transform_2, window_bounds = array<i64: 5, 46>}, {pipeline_mode = #tpu.pipeline_mode<synchronous>, transform_indices = @transform_3, window_bounds = array<i64: 5, 126>}, {pipeline_mode = #tpu.pipeline_mode<synchronous>, transform_indices = @transform_4, window_bounds = array<i64: 1, 324>}, {transform_indices = @transform_5, window_bounds = array<i64: 1, 5, 324>}]} {
    %cst = arith.constant 1.000000e+00 : f32
    %0 = vector.broadcast %cst : f32 to vector<1x324xf32>
    %c0 = arith.constant 0 : index
    %c0_0 = arith.constant 0 : index
    %1 = vector.load %arg7[%c0, %c0_0] : memref<126x324xf32, #tpu.memory_space<vmem>>, vector<1x324xf32>
    tpu.vector_store %arg7[%c0, %c0_0], %0 {strides = array<i32>} : memref<126x324xf32, #tpu.memory_space<vmem>>, vector<1x324xf32>,
    %c0_1 = arith.constant 0 : index
    %c0_2 = arith.constant 0 : index
    %2 = vector.load %arg5[%c0_1, %c0_2] : memref<1x324xf32, #tpu.memory_space<vmem>>, vector<1x324xf32>
    %cst_3 = arith.constant 0.000000e+00 : f32
    %3 = vector.broadcast %cst_3 : f32 to vector<1x324xf32>
    %4 = arith.cmpf one, %2, %3 : vector<1x324xf32>
    %c0_4 = arith.constant 0 : index
    %c0_5 = arith.constant 0 : index
    %c0_6 = arith.constant 0 : index
    %5 = vector.load %arg1[%c0_4, %c0_5, %c0_6] : memref<1x3x452xf32, #tpu.memory_space<vmem>>, vector<1x3x324xf32>
    %6 = vector.shape_cast %5 : vector<1x3x324xf32> to vector<3x324xf32>
    %c1 = arith.constant 1 : index
    %c0_7 = arith.constant 0 : index
    %7 = vector.load %arg7[%c1, %c0_7] : memref<126x324xf32, #tpu.memory_space<vmem>>, vector<3x324xf32>
    tpu.vector_store %arg7[%c1, %c0_7], %6 {strides = array<i32>} : memref<126x324xf32, #tpu.memory_space<vmem>>, vector<3x324xf32>,
    %c0_8 = arith.constant 0 : index
    %c0_9 = arith.constant 0 : index
    %c1_10 = arith.constant 1 : index
    %8 = vector.load %arg1[%c0_8, %c0_9, %c1_10] : memref<1x3x452xf32, #tpu.memory_space<vmem>>, vector<1x3x324xf32>
    %9 = vector.shape_cast %8 : vector<1x3x324xf32> to vector<3x324xf32>
    %c4 = arith.constant 4 : index
    %c0_11 = arith.constant 0 : index
    %10 = vector.load %arg7[%c4, %c0_11] : memref<126x324xf32, #tpu.memory_space<vmem>>, vector<3x324xf32>
    tpu.vector_store %arg7[%c4, %c0_11], %9 {strides = array<i32>} : memref<126x324xf32, #tpu.memory_space<vmem>>, vector<3x324xf32>,
    %c0_12 = arith.constant 0 : index
    %c0_13 = arith.constant 0 : index
    %c2 = arith.constant 2 : index
    %11 = vector.load %arg1[%c0_12, %c0_13, %c2] : memref<1x3x452xf32, #tpu.memory_space<vmem>>, vector<1x3x324xf32>
    %12 = vector.shape_cast %11 : vector<1x3x324xf32> to vector<3x324xf32>
    %c7 = arith.constant 7 : index
    %c0_14 = arith.constant 0 : index
    %13 = vector.load %arg7[%c7, %c0_14] : memref<126x324xf32, #tpu.memory_space<vmem>>, vector<3x324xf32>
    tpu.vector_store %arg7[%c7, %c0_14], %12 {strides = array<i32>} : memref<126x324xf32, #tpu.memory_space<vmem>>, vector<3x324xf32>,
    %c0_15 = arith.constant 0 : index
    %c0_16 = arith.constant 0 : index
    %c18 = arith.constant 18 : index
    %14 = vector.load %arg1[%c0_15, %c0_16, %c18] : memref<1x3x452xf32, #tpu.memory_space<vmem>>, vector<1x3x324xf32>
    %15 = vector.shape_cast %14 : vector<1x3x324xf32> to vector<3x324xf32>
    %c10 = arith.constant 10 : index
    %c0_17 = arith.constant 0 : index
    %16 = vector.load %arg7[%c10, %c0_17] : memref<126x324xf32, #tpu.memory_space<vmem>>, vector<3x324xf32>
    tpu.vector_store %arg7[%c10, %c0_17], %15 {strides = array<i32>} : memref<126x324xf32, #tpu.memory_space<vmem>>, vector<3x324xf32>,
    %c0_18 = arith.constant 0 : index
    %c0_19 = arith.constant 0 : index
    %c19 = arith.constant 19 : index
    %17 = vector.load %arg1[%c0_18, %c0_19, %c19] : memref<1x3x452xf32, #tpu.memory_space<vmem>>, vector<1x3x324xf32>
    %18 = vector.shape_cast %17 : vector<1x3x324xf32> to vector<3x324xf32>
    %c13 = arith.constant 13 : index
    %c0_20 = arith.constant 0 : index
    %19 = vector.load %arg7[%c13, %c0_20] : memref<126x324xf32, #tpu.memory_space<vmem>>, vector<3x324xf32>
    tpu.vector_store %arg7[%c13, %c0_20], %18 {strides = array<i32>} : memref<126x324xf32, #tpu.memory_space<vmem>>, vector<3x324xf32>,
    %c0_21 = arith.constant 0 : index
    %c0_22 = arith.constant 0 : index
    %c20 = arith.constant 20 : index
    %20 = vector.load %arg1[%c0_21, %c0_22, %c20] : memref<1x3x452xf32, #tpu.memory_space<vmem>>, vector<1x3x324xf32>
    %21 = vector.shape_cast %20 : vector<1x3x324xf32> to vector<3x324xf32>
    %c16 = arith.constant 16 : index
    %c0_23 = arith.constant 0 : index
    %22 = vector.load %arg7[%c16, %c0_23] : memref<126x324xf32, #tpu.memory_space<vmem>>, vector<3x324xf32>
    tpu.vector_store %arg7[%c16, %c0_23], %21 {strides = array<i32>} : memref<126x324xf32, #tpu.memory_space<vmem>>, vector<3x324xf32>,
    %c0_24 = arith.constant 0 : index
    %c0_25 = arith.constant 0 : index
    %c36 = arith.constant 36 : index
    %23 = vector.load %arg1[%c0_24, %c0_25, %c36] : memref<1x3x452xf32, #tpu.memory_space<vmem>>, vector<1x3x324xf32>
    %24 = vector.shape_cast %23 : vector<1x3x324xf32> to vector<3x324xf32>
    %c19_26 = arith.constant 19 : index
    %c0_27 = arith.constant 0 : index
    %25 = vector.load %arg7[%c19_26, %c0_27] : memref<126x324xf32, #tpu.memory_space<vmem>>, vector<3x324xf32>
    tpu.vector_store %arg7[%c19_26, %c0_27], %24 {strides = array<i32>} : memref<126x324xf32, #tpu.memory_space<vmem>>, vector<3x324xf32>,
    %c0_28 = arith.constant 0 : index
    %c0_29 = arith.constant 0 : index
    %c37 = arith.constant 37 : index
    %26 = vector.load %arg1[%c0_28, %c0_29, %c37] : memref<1x3x452xf32, #tpu.memory_space<vmem>>, vector<1x3x324xf32>
    %27 = vector.shape_cast %26 : vector<1x3x324xf32> to vector<3x324xf32>
    %c22 = arith.constant 22 : index
    %c0_30 = arith.constant 0 : index
    %28 = vector.load %arg7[%c22, %c0_30] : memref<126x324xf32, #tpu.memory_space<vmem>>, vector<3x324xf32>
    tpu.vector_store %arg7[%c22, %c0_30], %27 {strides = array<i32>} : memref<126x324xf32, #tpu.memory_space<vmem>>, vector<3x324xf32>,
    %c0_31 = arith.constant 0 : index
    %c0_32 = arith.constant 0 : index
    %c38 = arith.constant 38 : index
    %29 = vector.load %arg1[%c0_31, %c0_32, %c38] : memref<1x3x452xf32, #tpu.memory_space<vmem>>, vector<1x3x324xf32>
    %30 = vector.shape_cast %29 : vector<1x3x324xf32> to vector<3x324xf32>
    %c25 = arith.constant 25 : index
    %c0_33 = arith.constant 0 : index
    %31 = vector.load %arg7[%c25, %c0_33] : memref<126x324xf32, #tpu.memory_space<vmem>>, vector<3x324xf32>
    tpu.vector_store %arg7[%c25, %c0_33], %30 {strides = array<i32>} : memref<126x324xf32, #tpu.memory_space<vmem>>, vector<3x324xf32>,
    %c0_34 = arith.constant 0 : index
    %c0_35 = arith.constant 0 : index
    %32 = vector.load %arg2[%c0_34, %c0_35] : memref<5x28xbf16, #tpu.memory_space<vmem>>, vector<5x28xbf16>
    %c0_36 = arith.constant 0 : index
    %c0_37 = arith.constant 0 : index
    %33 = vector.load %arg7[%c0_36, %c0_37] : memref<126x324xf32, #tpu.memory_space<vmem>>, vector<28x324xf32>
    %34 = arith.truncf %33 : vector<28x324xf32> to vector<28x324xbf16>
    %cst_38 = arith.constant dense<0.000000e+00> : vector<5x324xf32>
    %35 = tpu.matmul %32, %34, %cst_38 {dimension_numbers = #tpu.dot_dimension_numbers<[1], [0], [0], [1], [0, 0, 1, 1], [], []>} : vector<5x28xbf16>, vector<28x324xbf16>, vector<5x324xf32> -> vector<5x324xf32>
    %cst_39 = arith.constant 0.000000e+00 : f32
    %36 = vector.broadcast %cst_39 : f32 to vector<5x324xf32>
    %37 = arith.maximumf %35, %36 : vector<5x324xf32>
    %cst_40 = arith.constant 0.000000e+00 : f32
    %38 = vector.shape_cast %4 : vector<1x324xi1> to vector<1x324xi1>
    %39 = vector.broadcast %38 : vector<1x324xi1> to vector<5x324xi1>
    %40 = vector.broadcast %cst_40 : f32 to vector<5x324xf32>
    %41 = arith.select %39, %37, %40 : vector<5x324xi1>, vector<5x324xf32>
    %cst_41 = arith.constant 0.000000e+00 : f32
    %42 = vector.broadcast %cst_41 : f32 to vector<5x19xf32>
    %c0_42 = arith.constant 0 : index
    %c0_43 = arith.constant 0 : index
    %43 = vector.load %arg8[%c0_42, %c0_43] : memref<5x452xf32, #tpu.memory_space<vmem>>, vector<5x19xf32>
    tpu.vector_store %arg8[%c0_42, %c0_43], %42 {strides = array<i32>} : memref<5x452xf32, #tpu.memory_space<vmem>>, vector<5x19xf32>,
    %c0_44 = arith.constant 0 : index
    %c19_45 = arith.constant 19 : index
    %44 = vector.load %arg8[%c0_44, %c19_45] : memref<5x452xf32, #tpu.memory_space<vmem>>, vector<5x324xf32>
    tpu.vector_store %arg8[%c0_44, %c19_45], %41 {strides = array<i32>} : memref<5x452xf32, #tpu.memory_space<vmem>>, vector<5x324xf32>,
    %c0_46 = arith.constant 0 : index
    %c0_47 = arith.constant 0 : index
    %45 = vector.load %arg8[%c0_46, %c0_47] : memref<5x452xf32, #tpu.memory_space<vmem>>, vector<5x324xf32>
    %c1_48 = arith.constant 1 : index
    %c0_49 = arith.constant 0 : index
    %46 = vector.load %arg7[%c1_48, %c0_49] : memref<126x324xf32, #tpu.memory_space<vmem>>, vector<5x324xf32>
    tpu.vector_store %arg7[%c1_48, %c0_49], %45 {strides = array<i32>} : memref<126x324xf32, #tpu.memory_space<vmem>>, vector<5x324xf32>,
    %c0_50 = arith.constant 0 : index
    %c1_51 = arith.constant 1 : index
    %47 = vector.load %arg8[%c0_50, %c1_51] : memref<5x452xf32, #tpu.memory_space<vmem>>, vector<5x324xf32>
    %c6 = arith.constant 6 : index
    %c0_52 = arith.constant 0 : index
    %48 = vector.load %arg7[%c6, %c0_52] : memref<126x324xf32, #tpu.memory_space<vmem>>, vector<5x324xf32>
    tpu.vector_store %arg7[%c6, %c0_52], %47 {strides = array<i32>} : memref<126x324xf32, #tpu.memory_space<vmem>>, vector<5x324xf32>,
    %c0_53 = arith.constant 0 : index
    %c2_54 = arith.constant 2 : index
    %49 = vector.load %arg8[%c0_53, %c2_54] : memref<5x452xf32, #tpu.memory_space<vmem>>, vector<5x324xf32>
    %c11 = arith.constant 11 : index
    %c0_55 = arith.constant 0 : index
    %50 = vector.load %arg7[%c11, %c0_55] : memref<126x324xf32, #tpu.memory_space<vmem>>, vector<5x324xf32>
    tpu.vector_store %arg7[%c11, %c0_55], %49 {strides = array<i32>} : memref<126x324xf32, #tpu.memory_space<vmem>>, vector<5x324xf32>,
    %c0_56 = arith.constant 0 : index
    %c18_57 = arith.constant 18 : index
    %51 = vector.load %arg8[%c0_56, %c18_57] : memref<5x452xf32, #tpu.memory_space<vmem>>, vector<5x324xf32>
    %c16_58 = arith.constant 16 : index
    %c0_59 = arith.constant 0 : index
    %52 = vector.load %arg7[%c16_58, %c0_59] : memref<126x324xf32, #tpu.memory_space<vmem>>, vector<5x324xf32>
    tpu.vector_store %arg7[%c16_58, %c0_59], %51 {strides = array<i32>} : memref<126x324xf32, #tpu.memory_space<vmem>>, vector<5x324xf32>,
    %c0_60 = arith.constant 0 : index
    %c19_61 = arith.constant 19 : index
    %53 = vector.load %arg8[%c0_60, %c19_61] : memref<5x452xf32, #tpu.memory_space<vmem>>, vector<5x324xf32>
    %c21 = arith.constant 21 : index
    %c0_62 = arith.constant 0 : index
    %54 = vector.load %arg7[%c21, %c0_62] : memref<126x324xf32, #tpu.memory_space<vmem>>, vector<5x324xf32>
    tpu.vector_store %arg7[%c21, %c0_62], %53 {strides = array<i32>} : memref<126x324xf32, #tpu.memory_space<vmem>>, vector<5x324xf32>,
    %c0_63 = arith.constant 0 : index
    %c20_64 = arith.constant 20 : index
    %55 = vector.load %arg8[%c0_63, %c20_64] : memref<5x452xf32, #tpu.memory_space<vmem>>, vector<5x324xf32>
    %c26 = arith.constant 26 : index
    %c0_65 = arith.constant 0 : index
    %56 = vector.load %arg7[%c26, %c0_65] : memref<126x324xf32, #tpu.memory_space<vmem>>, vector<5x324xf32>
    tpu.vector_store %arg7[%c26, %c0_65], %55 {strides = array<i32>} : memref<126x324xf32, #tpu.memory_space<vmem>>, vector<5x324xf32>,
    %c0_66 = arith.constant 0 : index
    %c36_67 = arith.constant 36 : index
    %57 = vector.load %arg8[%c0_66, %c36_67] : memref<5x452xf32, #tpu.memory_space<vmem>>, vector<5x324xf32>
    %c31 = arith.constant 31 : index
    %c0_68 = arith.constant 0 : index
    %58 = vector.load %arg7[%c31, %c0_68] : memref<126x324xf32, #tpu.memory_space<vmem>>, vector<5x324xf32>
    tpu.vector_store %arg7[%c31, %c0_68], %57 {strides = array<i32>} : memref<126x324xf32, #tpu.memory_space<vmem>>, vector<5x324xf32>,
    %c0_69 = arith.constant 0 : index
    %c37_70 = arith.constant 37 : index
    %59 = vector.load %arg8[%c0_69, %c37_70] : memref<5x452xf32, #tpu.memory_space<vmem>>, vector<5x324xf32>
    %c36_71 = arith.constant 36 : index
    %c0_72 = arith.constant 0 : index
    %60 = vector.load %arg7[%c36_71, %c0_72] : memref<126x324xf32, #tpu.memory_space<vmem>>, vector<5x324xf32>
    tpu.vector_store %arg7[%c36_71, %c0_72], %59 {strides = array<i32>} : memref<126x324xf32, #tpu.memory_space<vmem>>, vector<5x324xf32>,
    %c0_73 = arith.constant 0 : index
    %c38_74 = arith.constant 38 : index
    %61 = vector.load %arg8[%c0_73, %c38_74] : memref<5x452xf32, #tpu.memory_space<vmem>>, vector<5x324xf32>
    %c41 = arith.constant 41 : index
    %c0_75 = arith.constant 0 : index
    %62 = vector.load %arg7[%c41, %c0_75] : memref<126x324xf32, #tpu.memory_space<vmem>>, vector<5x324xf32>
    tpu.vector_store %arg7[%c41, %c0_75], %61 {strides = array<i32>} : memref<126x324xf32, #tpu.memory_space<vmem>>, vector<5x324xf32>,
    %c0_76 = arith.constant 0 : index
    %c0_77 = arith.constant 0 : index
    %63 = vector.load %arg3[%c0_76, %c0_77] : memref<5x46xbf16, #tpu.memory_space<vmem>>, vector<5x46xbf16>
    %c0_78 = arith.constant 0 : index
    %c0_79 = arith.constant 0 : index
    %64 = vector.load %arg7[%c0_78, %c0_79] : memref<126x324xf32, #tpu.memory_space<vmem>>, vector<46x324xf32>
    %65 = arith.truncf %64 : vector<46x324xf32> to vector<46x324xbf16>
    %cst_80 = arith.constant dense<0.000000e+00> : vector<5x324xf32>
    %66 = tpu.matmul %63, %65, %cst_80 {dimension_numbers = #tpu.dot_dimension_numbers<[1], [0], [0], [1], [0, 0, 1, 1], [], []>} : vector<5x46xbf16>, vector<46x324xbf16>, vector<5x324xf32> -> vector<5x324xf32>
    %cst_81 = arith.constant 0.000000e+00 : f32
    %67 = vector.broadcast %cst_81 : f32 to vector<5x324xf32>
    %68 = arith.maximumf %66, %67 : vector<5x324xf32>
    %cst_82 = arith.constant 0.000000e+00 : f32
    %69 = vector.shape_cast %4 : vector<1x324xi1> to vector<1x324xi1>
    %70 = vector.broadcast %69 : vector<1x324xi1> to vector<5x324xi1>
    %71 = vector.broadcast %cst_82 : f32 to vector<5x324xf32>
    %72 = arith.select %70, %68, %71 : vector<5x324xi1>, vector<5x324xf32>
    %cst_83 = arith.constant 0.000000e+00 : f32
    %73 = vector.broadcast %cst_83 : f32 to vector<5x19xf32>
    %c0_84 = arith.constant 0 : index
    %c0_85 = arith.constant 0 : index
    %74 = vector.load %arg9[%c0_84, %c0_85] : memref<5x452xf32, #tpu.memory_space<vmem>>, vector<5x19xf32>
    tpu.vector_store %arg9[%c0_84, %c0_85], %73 {strides = array<i32>} : memref<5x452xf32, #tpu.memory_space<vmem>>, vector<5x19xf32>,
    %c0_86 = arith.constant 0 : index
    %c19_87 = arith.constant 19 : index
    %75 = vector.load %arg9[%c0_86, %c19_87] : memref<5x452xf32, #tpu.memory_space<vmem>>, vector<5x324xf32>
    tpu.vector_store %arg9[%c0_86, %c19_87], %72 {strides = array<i32>} : memref<5x452xf32, #tpu.memory_space<vmem>>, vector<5x324xf32>,
    %c0_88 = arith.constant 0 : index
    %c19_89 = arith.constant 19 : index
    %76 = vector.load %arg9[%c0_88, %c19_89] : memref<5x452xf32, #tpu.memory_space<vmem>>, vector<5x324xf32>
    %c1_90 = arith.constant 1 : index
    %c0_91 = arith.constant 0 : index
    %77 = vector.load %arg7[%c1_90, %c0_91] : memref<126x324xf32, #tpu.memory_space<vmem>>, vector<5x324xf32>
    tpu.vector_store %arg7[%c1_90, %c0_91], %76 {strides = array<i32>} : memref<126x324xf32, #tpu.memory_space<vmem>>, vector<5x324xf32>,
    %c0_92 = arith.constant 0 : index
    %c20_93 = arith.constant 20 : index
    %78 = vector.load %arg9[%c0_92, %c20_93] : memref<5x452xf32, #tpu.memory_space<vmem>>, vector<5x324xf32>
    %c6_94 = arith.constant 6 : index
    %c0_95 = arith.constant 0 : index
    %79 = vector.load %arg7[%c6_94, %c0_95] : memref<126x324xf32, #tpu.memory_space<vmem>>, vector<5x324xf32>
    tpu.vector_store %arg7[%c6_94, %c0_95], %78 {strides = array<i32>} : memref<126x324xf32, #tpu.memory_space<vmem>>, vector<5x324xf32>,
    %c0_96 = arith.constant 0 : index
    %c21_97 = arith.constant 21 : index
    %80 = vector.load %arg9[%c0_96, %c21_97] : memref<5x452xf32, #tpu.memory_space<vmem>>, vector<5x324xf32>
    %c11_98 = arith.constant 11 : index
    %c0_99 = arith.constant 0 : index
    %81 = vector.load %arg7[%c11_98, %c0_99] : memref<126x324xf32, #tpu.memory_space<vmem>>, vector<5x324xf32>
    tpu.vector_store %arg7[%c11_98, %c0_99], %80 {strides = array<i32>} : memref<126x324xf32, #tpu.memory_space<vmem>>, vector<5x324xf32>,
    %c0_100 = arith.constant 0 : index
    %c22_101 = arith.constant 22 : index
    %82 = vector.load %arg9[%c0_100, %c22_101] : memref<5x452xf32, #tpu.memory_space<vmem>>, vector<5x324xf32>
    %c16_102 = arith.constant 16 : index
    %c0_103 = arith.constant 0 : index
    %83 = vector.load %arg7[%c16_102, %c0_103] : memref<126x324xf32, #tpu.memory_space<vmem>>, vector<5x324xf32>
    tpu.vector_store %arg7[%c16_102, %c0_103], %82 {strides = array<i32>} : memref<126x324xf32, #tpu.memory_space<vmem>>, vector<5x324xf32>,
    %c0_104 = arith.constant 0 : index
    %c23 = arith.constant 23 : index
    %84 = vector.load %arg9[%c0_104, %c23] : memref<5x452xf32, #tpu.memory_space<vmem>>, vector<5x324xf32>
    %c21_105 = arith.constant 21 : index
    %c0_106 = arith.constant 0 : index
    %85 = vector.load %arg7[%c21_105, %c0_106] : memref<126x324xf32, #tpu.memory_space<vmem>>, vector<5x324xf32>
    tpu.vector_store %arg7[%c21_105, %c0_106], %84 {strides = array<i32>} : memref<126x324xf32, #tpu.memory_space<vmem>>, vector<5x324xf32>,
    %c0_107 = arith.constant 0 : index
    %c37_108 = arith.constant 37 : index
    %86 = vector.load %arg9[%c0_107, %c37_108] : memref<5x452xf32, #tpu.memory_space<vmem>>, vector<5x324xf32>
    %c26_109 = arith.constant 26 : index
    %c0_110 = arith.constant 0 : index
    %87 = vector.load %arg7[%c26_109, %c0_110] : memref<126x324xf32, #tpu.memory_space<vmem>>, vector<5x324xf32>
    tpu.vector_store %arg7[%c26_109, %c0_110], %86 {strides = array<i32>} : memref<126x324xf32, #tpu.memory_space<vmem>>, vector<5x324xf32>,
    %c0_111 = arith.constant 0 : index
    %c38_112 = arith.constant 38 : index
    %88 = vector.load %arg9[%c0_111, %c38_112] : memref<5x452xf32, #tpu.memory_space<vmem>>, vector<5x324xf32>
    %c31_113 = arith.constant 31 : index
    %c0_114 = arith.constant 0 : index
    %89 = vector.load %arg7[%c31_113, %c0_114] : memref<126x324xf32, #tpu.memory_space<vmem>>, vector<5x324xf32>
    tpu.vector_store %arg7[%c31_113, %c0_114], %88 {strides = array<i32>} : memref<126x324xf32, #tpu.memory_space<vmem>>, vector<5x324xf32>,
    %c0_115 = arith.constant 0 : index
    %c39 = arith.constant 39 : index
    %90 = vector.load %arg9[%c0_115, %c39] : memref<5x452xf32, #tpu.memory_space<vmem>>, vector<5x324xf32>
    %c36_116 = arith.constant 36 : index
    %c0_117 = arith.constant 0 : index
    %91 = vector.load %arg7[%c36_116, %c0_117] : memref<126x324xf32, #tpu.memory_space<vmem>>, vector<5x324xf32>
    tpu.vector_store %arg7[%c36_116, %c0_117], %90 {strides = array<i32>} : memref<126x324xf32, #tpu.memory_space<vmem>>, vector<5x324xf32>,
    %c0_118 = arith.constant 0 : index
    %c40 = arith.constant 40 : index
    %92 = vector.load %arg9[%c0_118, %c40] : memref<5x452xf32, #tpu.memory_space<vmem>>, vector<5x324xf32>
    %c41_119 = arith.constant 41 : index
    %c0_120 = arith.constant 0 : index
    %93 = vector.load %arg7[%c41_119, %c0_120] : memref<126x324xf32, #tpu.memory_space<vmem>>, vector<5x324xf32>
    tpu.vector_store %arg7[%c41_119, %c0_120], %92 {strides = array<i32>} : memref<126x324xf32, #tpu.memory_space<vmem>>, vector<5x324xf32>,
    %c0_121 = arith.constant 0 : index
    %c41_122 = arith.constant 41 : index
    %94 = vector.load %arg9[%c0_121, %c41_122] : memref<5x452xf32, #tpu.memory_space<vmem>>, vector<5x324xf32>
    %c46 = arith.constant 46 : index
    %c0_123 = arith.constant 0 : index
    %95 = vector.load %arg7[%c46, %c0_123] : memref<126x324xf32, #tpu.memory_space<vmem>>, vector<5x324xf32>
    tpu.vector_store %arg7[%c46, %c0_123], %94 {strides = array<i32>} : memref<126x324xf32, #tpu.memory_space<vmem>>, vector<5x324xf32>,
    %c0_124 = arith.constant 0 : index
    %c55 = arith.constant 55 : index
    %96 = vector.load %arg9[%c0_124, %c55] : memref<5x452xf32, #tpu.memory_space<vmem>>, vector<5x324xf32>
    %c51 = arith.constant 51 : index
    %c0_125 = arith.constant 0 : index
    %97 = vector.load %arg7[%c51, %c0_125] : memref<126x324xf32, #tpu.memory_space<vmem>>, vector<5x324xf32>
    tpu.vector_store %arg7[%c51, %c0_125], %96 {strides = array<i32>} : memref<126x324xf32, #tpu.memory_space<vmem>>, vector<5x324xf32>,
    %c0_126 = arith.constant 0 : index
    %c56 = arith.constant 56 : index
    %98 = vector.load %arg9[%c0_126, %c56] : memref<5x452xf32, #tpu.memory_space<vmem>>, vector<5x324xf32>
    %c56_127 = arith.constant 56 : index
    %c0_128 = arith.constant 0 : index
    %99 = vector.load %arg7[%c56_127, %c0_128] : memref<126x324xf32, #tpu.memory_space<vmem>>, vector<5x324xf32>
    tpu.vector_store %arg7[%c56_127, %c0_128], %98 {strides = array<i32>} : memref<126x324xf32, #tpu.memory_space<vmem>>, vector<5x324xf32>,
    %c0_129 = arith.constant 0 : index
    %c57 = arith.constant 57 : index
    %100 = vector.load %arg9[%c0_129, %c57] : memref<5x452xf32, #tpu.memory_space<vmem>>, vector<5x324xf32>
    %c61 = arith.constant 61 : index
    %c0_130 = arith.constant 0 : index
    %101 = vector.load %arg7[%c61, %c0_130] : memref<126x324xf32, #tpu.memory_space<vmem>>, vector<5x324xf32>
    tpu.vector_store %arg7[%c61, %c0_130], %100 {strides = array<i32>} : memref<126x324xf32, #tpu.memory_space<vmem>>, vector<5x324xf32>,
    %c0_131 = arith.constant 0 : index
    %c58 = arith.constant 58 : index
    %102 = vector.load %arg9[%c0_131, %c58] : memref<5x452xf32, #tpu.memory_space<vmem>>, vector<5x324xf32>
    %c66 = arith.constant 66 : index
    %c0_132 = arith.constant 0 : index
    %103 = vector.load %arg7[%c66, %c0_132] : memref<126x324xf32, #tpu.memory_space<vmem>>, vector<5x324xf32>
    tpu.vector_store %arg7[%c66, %c0_132], %102 {strides = array<i32>} : memref<126x324xf32, #tpu.memory_space<vmem>>, vector<5x324xf32>,
    %c0_133 = arith.constant 0 : index
    %c59 = arith.constant 59 : index
    %104 = vector.load %arg9[%c0_133, %c59] : memref<5x452xf32, #tpu.memory_space<vmem>>, vector<5x324xf32>
    %c71 = arith.constant 71 : index
    %c0_134 = arith.constant 0 : index
    %105 = vector.load %arg7[%c71, %c0_134] : memref<126x324xf32, #tpu.memory_space<vmem>>, vector<5x324xf32>
    tpu.vector_store %arg7[%c71, %c0_134], %104 {strides = array<i32>} : memref<126x324xf32, #tpu.memory_space<vmem>>, vector<5x324xf32>,
    %c0_135 = arith.constant 0 : index
    %c73 = arith.constant 73 : index
    %106 = vector.load %arg9[%c0_135, %c73] : memref<5x452xf32, #tpu.memory_space<vmem>>, vector<5x324xf32>
    %c76 = arith.constant 76 : index
    %c0_136 = arith.constant 0 : index
    %107 = vector.load %arg7[%c76, %c0_136] : memref<126x324xf32, #tpu.memory_space<vmem>>, vector<5x324xf32>
    tpu.vector_store %arg7[%c76, %c0_136], %106 {strides = array<i32>} : memref<126x324xf32, #tpu.memory_space<vmem>>, vector<5x324xf32>,
    %c0_137 = arith.constant 0 : index
    %c74 = arith.constant 74 : index
    %108 = vector.load %arg9[%c0_137, %c74] : memref<5x452xf32, #tpu.memory_space<vmem>>, vector<5x324xf32>
    %c81 = arith.constant 81 : index
    %c0_138 = arith.constant 0 : index
    %109 = vector.load %arg7[%c81, %c0_138] : memref<126x324xf32, #tpu.memory_space<vmem>>, vector<5x324xf32>
    tpu.vector_store %arg7[%c81, %c0_138], %108 {strides = array<i32>} : memref<126x324xf32, #tpu.memory_space<vmem>>, vector<5x324xf32>,
    %c0_139 = arith.constant 0 : index
    %c75 = arith.constant 75 : index
    %110 = vector.load %arg9[%c0_139, %c75] : memref<5x452xf32, #tpu.memory_space<vmem>>, vector<5x324xf32>
    %c86 = arith.constant 86 : index
    %c0_140 = arith.constant 0 : index
    %111 = vector.load %arg7[%c86, %c0_140] : memref<126x324xf32, #tpu.memory_space<vmem>>, vector<5x324xf32>
    tpu.vector_store %arg7[%c86, %c0_140], %110 {strides = array<i32>} : memref<126x324xf32, #tpu.memory_space<vmem>>, vector<5x324xf32>,
    %c0_141 = arith.constant 0 : index
    %c76_142 = arith.constant 76 : index
    %112 = vector.load %arg9[%c0_141, %c76_142] : memref<5x452xf32, #tpu.memory_space<vmem>>, vector<5x324xf32>
    %c91 = arith.constant 91 : index
    %c0_143 = arith.constant 0 : index
    %113 = vector.load %arg7[%c91, %c0_143] : memref<126x324xf32, #tpu.memory_space<vmem>>, vector<5x324xf32>
    tpu.vector_store %arg7[%c91, %c0_143], %112 {strides = array<i32>} : memref<126x324xf32, #tpu.memory_space<vmem>>, vector<5x324xf32>,
    %c0_144 = arith.constant 0 : index
    %c77 = arith.constant 77 : index
    %114 = vector.load %arg9[%c0_144, %c77] : memref<5x452xf32, #tpu.memory_space<vmem>>, vector<5x324xf32>
    %c96 = arith.constant 96 : index
    %c0_145 = arith.constant 0 : index
    %115 = vector.load %arg7[%c96, %c0_145] : memref<126x324xf32, #tpu.memory_space<vmem>>, vector<5x324xf32>
    tpu.vector_store %arg7[%c96, %c0_145], %114 {strides = array<i32>} : memref<126x324xf32, #tpu.memory_space<vmem>>, vector<5x324xf32>,
    %c0_146 = arith.constant 0 : index
    %c91_147 = arith.constant 91 : index
    %116 = vector.load %arg9[%c0_146, %c91_147] : memref<5x452xf32, #tpu.memory_space<vmem>>, vector<5x324xf32>
    %c101 = arith.constant 101 : index
    %c0_148 = arith.constant 0 : index
    %117 = vector.load %arg7[%c101, %c0_148] : memref<126x324xf32, #tpu.memory_space<vmem>>, vector<5x324xf32>
    tpu.vector_store %arg7[%c101, %c0_148], %116 {strides = array<i32>} : memref<126x324xf32, #tpu.memory_space<vmem>>, vector<5x324xf32>,
    %c0_149 = arith.constant 0 : index
    %c92 = arith.constant 92 : index
    %118 = vector.load %arg9[%c0_149, %c92] : memref<5x452xf32, #tpu.memory_space<vmem>>, vector<5x324xf32>
    %c106 = arith.constant 106 : index
    %c0_150 = arith.constant 0 : index
    %119 = vector.load %arg7[%c106, %c0_150] : memref<126x324xf32, #tpu.memory_space<vmem>>, vector<5x324xf32>
    tpu.vector_store %arg7[%c106, %c0_150], %118 {strides = array<i32>} : memref<126x324xf32, #tpu.memory_space<vmem>>, vector<5x324xf32>,
    %c0_151 = arith.constant 0 : index
    %c93 = arith.constant 93 : index
    %120 = vector.load %arg9[%c0_151, %c93] : memref<5x452xf32, #tpu.memory_space<vmem>>, vector<5x324xf32>
    %c111 = arith.constant 111 : index
    %c0_152 = arith.constant 0 : index
    %121 = vector.load %arg7[%c111, %c0_152] : memref<126x324xf32, #tpu.memory_space<vmem>>, vector<5x324xf32>
    tpu.vector_store %arg7[%c111, %c0_152], %120 {strides = array<i32>} : memref<126x324xf32, #tpu.memory_space<vmem>>, vector<5x324xf32>,
    %c0_153 = arith.constant 0 : index
    %c94 = arith.constant 94 : index
    %122 = vector.load %arg9[%c0_153, %c94] : memref<5x452xf32, #tpu.memory_space<vmem>>, vector<5x324xf32>
    %c116 = arith.constant 116 : index
    %c0_154 = arith.constant 0 : index
    %123 = vector.load %arg7[%c116, %c0_154] : memref<126x324xf32, #tpu.memory_space<vmem>>, vector<5x324xf32>
    tpu.vector_store %arg7[%c116, %c0_154], %122 {strides = array<i32>} : memref<126x324xf32, #tpu.memory_space<vmem>>, vector<5x324xf32>,
    %c0_155 = arith.constant 0 : index
    %c95 = arith.constant 95 : index
    %124 = vector.load %arg9[%c0_155, %c95] : memref<5x452xf32, #tpu.memory_space<vmem>>, vector<5x324xf32>
    %c121 = arith.constant 121 : index
    %c0_156 = arith.constant 0 : index
    %125 = vector.load %arg7[%c121, %c0_156] : memref<126x324xf32, #tpu.memory_space<vmem>>, vector<5x324xf32>
    tpu.vector_store %arg7[%c121, %c0_156], %124 {strides = array<i32>} : memref<126x324xf32, #tpu.memory_space<vmem>>, vector<5x324xf32>,
    %c0_157 = arith.constant 0 : index
    %c0_158 = arith.constant 0 : index
    %126 = vector.load %arg4[%c0_157, %c0_158] : memref<5x126xbf16, #tpu.memory_space<vmem>>, vector<5x126xbf16>
    %c0_159 = arith.constant 0 : index
    %c0_160 = arith.constant 0 : index
    %127 = vector.load %arg7[%c0_159, %c0_160] : memref<126x324xf32, #tpu.memory_space<vmem>>, vector<126x324xf32>
    %128 = arith.truncf %127 : vector<126x324xf32> to vector<126x324xbf16>
    %cst_161 = arith.constant dense<0.000000e+00> : vector<5x324xf32>
    %129 = tpu.matmul %126, %128, %cst_161 {dimension_numbers = #tpu.dot_dimension_numbers<[1], [0], [0], [1], [0, 0, 1, 1], [], []>} : vector<5x126xbf16>, vector<126x324xbf16>, vector<5x324xf32> -> vector<5x324xf32>
    %c0_162 = arith.constant 0 : index
    %c0_163 = arith.constant 0 : index
    %c0_164 = arith.constant 0 : index
    %130 = vector.load %arg6[%c0_162, %c0_163, %c0_164] : memref<1x5x324xf32, #tpu.memory_space<vmem>>, vector<1x5x324xf32>
    %131 = vector.shape_cast %130 : vector<1x5x324xf32> to vector<5x324xf32>
    %132 = vector.shape_cast %129 : vector<5x324xf32> to vector<1x5x324xf32>
    tpu.vector_store %arg6[%c0_162, %c0_163, %c0_164], %132 {strides = array<i32>} : memref<1x5x324xf32, #tpu.memory_space<vmem>>, vector<1x5x324xf32>,
    return
  }
  func.func @transform_0(%arg0: i32) -> (i32, i32, i32) {
    %c0_i32 = arith.constant 0 : i32
    %c0_i32_0 = arith.constant 0 : i32
    %c0_i32_1 = arith.constant 0 : i32
    return %arg0, %c0_i32, %c0_i32_0 : i32, i32, i32
  }
  func.func @transform_1(%arg0: i32) -> (i32, i32) {
    %c0_i32 = arith.constant 0 : i32
    %c0_i32_0 = arith.constant 0 : i32
    %c0_i32_1 = arith.constant 0 : i32
    return %c0_i32, %c0_i32_0 : i32, i32
  }
  func.func @transform_2(%arg0: i32) -> (i32, i32) {
    %c0_i32 = arith.constant 0 : i32
    %c0_i32_0 = arith.constant 0 : i32
    %c0_i32_1 = arith.constant 0 : i32
    return %c0_i32, %c0_i32_0 : i32, i32
  }
  func.func @transform_3(%arg0: i32) -> (i32, i32) {
    %c0_i32 = arith.constant 0 : i32
    %c0_i32_0 = arith.constant 0 : i32
    %c0_i32_1 = arith.constant 0 : i32
    return %c0_i32, %c0_i32_0 : i32, i32
  }
  func.func @transform_4(%arg0: i32) -> (i32, i32) {
    %c0_i32 = arith.constant 0 : i32
    %c0_i32_0 = arith.constant 0 : i32
    %c0_i32_1 = arith.constant 0 : i32
    return %c0_i32, %c0_i32_0 : i32, i32
  }
  func.func @transform_5(%arg0: i32) -> (i32, i32, i32) {
    %c0_i32 = arith.constant 0 : i32
    %c0_i32_0 = arith.constant 0 : i32
    %c0_i32_1 = arith.constant 0 : i32
    return %arg0, %c0_i32, %c0_i32_0 : i32, i32, i32
  }
}

</mosaic_0001>

<llo_original>
// kernel: res50_forward.1
$region0: #{res50_forward.1}
  #allocation0 [shape = 'u32[]', space=smem, size = 0x4, offset = 0x4, fixed_abs, tag = 'smem constant byte address 0x4 - core index']
  #allocation1 [shape = 'u32[144,128]{1,0:T(1,128)}', space=vmem, size = 0x12000, scoped, tag = 'internal scratch']
  #allocation2 [shape = 'f32[126,324]{1,0:T(8,128)}', space=vmem, size = 0x30000, scoped, tag = 'scratch operand']
  #allocation3 [shape = 'f32[5,452]{1,0:T(8,128)}', space=vmem, size = 0x4000, scoped, tag = 'scratch operand']
  #allocation4 [shape = 'f32[5,452]{1,0:T(8,128)}', space=vmem, size = 0x4000, scoped, tag = 'scratch operand']
  %s0 = inlined_call_operand.vmem [shape: f32[2,3,452], index: 0, kind: input, shape index: {}]
  %s1 = inlined_call_operand.vmem [shape: bf16[5,28], index: 1, kind: input, shape index: {}]
  %s2 = inlined_call_operand.vmem [shape: bf16[5,46], index: 2, kind: input, shape index: {}]
  %s3 = inlined_call_operand.vmem [shape: bf16[5,126], index: 3, kind: input, shape index: {}]
  %s4 = inlined_call_operand.vmem [shape: f32[1,324], index: 4, kind: input, shape index: {}]
  %s5 = inlined_call_operand.vmem [shape: f32[2,5,324], index: 5, kind: output, shape index: {}]
  %s6 = sld [smem:[#allocation0]]
  $region53: #{res50_forward.1} parent=0
    _
  %s8 = ssub.s32 1, %s6
  %s9 = scalar_select 0, %s8, %s6
  loop: start=0, step=1, limit=4
  $region2: #{res50_forward.1} parent=0 // loop_pre_header
    _
  $region3: #{res50_forward.1} parent=0 // loop_header
    %s11 = sphi 0, %s15
    %p12 = scmp.ge.s32.totalorder %s11, 4
    %s21 = sphi 0, %s23
    %s24 = sphi 0, %s21
    %s25 = sphi 0, %s24
    %s41 = sphi 0, %s25
    %s45 = sphi 0, %s45
    %s47 = sphi 0, %s45
    %s48 = sphi 0, %s47
    %s62 = sphi 0, %s48
    %s66 = sphi 0, %s66
    %s68 = sphi 0, %s66
    %s69 = sphi 0, %s68
    %s83 = sphi 0, %s69
    %s87 = sphi 0, %s87
    %s89 = sphi 0, %s87
    %s90 = sphi 0, %s89
    %s104 = sphi 0, %s90
    %s108 = sphi 0, %s108
    %s110 = sphi 0, %s108
    %s111 = sphi 0, %s110
    %s125 = sphi 0, %s111
    %s131 = sphi 0, %s133
    %s134 = sphi 0, %s131
    %s135 = sphi 0, %s134
    %s151 = sphi 0, %s135
  $region4: #{res50_forward.1} parent=0 // loop_header_branch
    %14 = sbr.rel (%p12) target = $region8
  $region5: #{res50_forward.1} parent=0 // loop_body
    %s16 = ssub.s32 %s11, 1
    %s17 = ssub.s32 %s11, 2
    %s18 = sadd.s32 %s11, 1
    %s19 = ssub.s32 %s11, %s18
    %p20 = scmp.eq.s32.totalorder %s19, 0
    %s22 = sadd.s32 %s21, 1
    %s23 = scalar_select %p20, %s21, %s22
    %p26 = pneg %p20
    %p27 = scmp.eq.s32.totalorder %s11, 1
    %p28 = por %p26, %p27
    %p29 = scmp.ne.s32.totalorder %s21, %s24
    %p30 = scmp.eq.s32.totalorder %s11, 0
    %p31 = por %p29, %p30
    %p32 = scmp.ne.s32.totalorder %s21, %s24
    %p33 = scmp.eq.s32.totalorder %s16, 1
    %p34 = por %p32, %p33
    %p35 = scmp.ne.s32.totalorder %s24, %s25
    %p36 = scmp.eq.s32.totalorder %s16, 0
    %p37 = por %p35, %p36
    %p38 = scmp.ne.s32.totalorder %s24, %s25
    %p39 = scmp.eq.s32.totalorder %s17, 1
    %p40 = por %p38, %p39
    %p42 = scmp.ne.s32.totalorder %s25, %s41
    %p43 = scmp.eq.s32.totalorder %s17, 0
    %p44 = por %p42, %p43
    %s46 = sadd.s32 %s45, 1
    %p49 = scmp.eq.s32.totalorder %s11, 1
    %p50 = scmp.ne.s32.totalorder %s45, %s47
    %p51 = scmp.eq.s32.totalorder %s11, 0
    %p52 = por %p50, %p51
    %p53 = scmp.ne.s32.totalorder %s45, %s47
    %p54 = scmp.eq.s32.totalorder %s16, 1
    %p55 = por %p53, %p54
    %p56 = scmp.ne.s32.totalorder %s47, %s48
    %p57 = scmp.eq.s32.totalorder %s16, 0
    %p58 = por %p56, %p57
    %p59 = scmp.ne.s32.totalorder %s47, %s48
    %p60 = scmp.eq.s32.totalorder %s17, 1
    %p61 = por %p59, %p60
    %p63 = scmp.ne.s32.totalorder %s48, %s62
    %p64 = scmp.eq.s32.totalorder %s17, 0
    %p65 = por %p63, %p64
    %s67 = sadd.s32 %s66, 1
    %p70 = scmp.eq.s32.totalorder %s11, 1
    %p71 = scmp.ne.s32.totalorder %s66, %s68
    %p72 = scmp.eq.s32.totalorder %s11, 0
    %p73 = por %p71, %p72
    %p74 = scmp.ne.s32.totalorder %s66, %s68
    %p75 = scmp.eq.s32.totalorder %s16, 1
    %p76 = por %p74, %p75
    %p77 = scmp.ne.s32.totalorder %s68, %s69
    %p78 = scmp.eq.s32.totalorder %s16, 0
    %p79 = por %p77, %p78
    %p80 = scmp.ne.s32.totalorder %s68, %s69
    %p81 = scmp.eq.s32.totalorder %s17, 1
    %p82 = por %p80, %p81
    %p84 = scmp.ne.s32.totalorder %s69, %s83
    %p85 = scmp.eq.s32.totalorder %s17, 0
    %p86 = por %p84, %p85
    %s88 = sadd.s32 %s87, 1
    %p91 = scmp.eq.s32.totalorder %s11, 1
    %p92 = scmp.ne.s32.totalorder %s87, %s89
    %p93 = scmp.eq.s32.totalorder %s11, 0
    %p94 = por %p92, %p93
    %p95 = scmp.ne.s32.totalorder %s87, %s89
    %p96 = scmp.eq.s32.totalorder %s16, 1
    %p97 = por %p95, %p96
    %p98 = scmp.ne.s32.totalorder %s89, %s90
    %p99 = scmp.eq.s32.totalorder %s16, 0
    %p100 = por %p98, %p99
    %p101 = scmp.ne.s32.totalorder %s89, %s90
    %p102 = scmp.eq.s32.totalorder %s17, 1
    %p103 = por %p101, %p102
    %p105 = scmp.ne.s32.totalorder %s90, %s104
    %p106 = scmp.eq.s32.totalorder %s17, 0
    %p107 = por %p105, %p106
    %s109 = sadd.s32 %s108, 1
    %p112 = scmp.eq.s32.totalorder %s11, 1
    %p113 = scmp.ne.s32.totalorder %s108, %s110
    %p114 = scmp.eq.s32.totalorder %s11, 0
    %p115 = por %p113, %p114
    %p116 = scmp.ne.s32.totalorder %s108, %s110
    %p117 = scmp.eq.s32.totalorder %s16, 1
    %p118 = por %p116, %p117
    %p119 = scmp.ne.s32.totalorder %s110, %s111
    %p120 = scmp.eq.s32.totalorder %s16, 0
    %p121 = por %p119, %p120
    %p122 = scmp.ne.s32.totalorder %s110, %s111
    %p123 = scmp.eq.s32.totalorder %s17, 1
    %p124 = por %p122, %p123
    %p126 = scmp.ne.s32.totalorder %s111, %s125
    %p127 = scmp.eq.s32.totalorder %s17, 0
    %p128 = por %p126, %p127
    %s129 = ssub.s32 %s11, %s18
    %p130 = scmp.eq.s32.totalorder %s129, 0
    %s132 = sadd.s32 %s131, 1
    %s133 = scalar_select %p130, %s131, %s132
    %p136 = pneg %p130
    %p137 = scmp.eq.s32.totalorder %s11, 1
    %p138 = por %p136, %p137
    %p139 = scmp.ne.s32.totalorder %s131, %s134
    %p140 = scmp.eq.s32.totalorder %s11, 0
    %p141 = por %p139, %p140
    %p142 = scmp.ne.s32.totalorder %s131, %s134
    %p143 = scmp.eq.s32.totalorder %s16, 1
    %p144 = por %p142, %p143
    %p145 = scmp.ne.s32.totalorder %s134, %s135
    %p146 = scmp.eq.s32.totalorder %s16, 0
    %p147 = por %p145, %p146
    %p148 = scmp.ne.s32.totalorder %s134, %s135
    %p149 = scmp.eq.s32.totalorder %s17, 1
    %p150 = por %p148, %p149
    %p152 = scmp.ne.s32.totalorder %s135, %s151
    %p153 = scmp.eq.s32.totalorder %s17, 0
    %p154 = por %p152, %p153
    %p155 = scmp.le.s32.totalorder 1, %s11
    %p156 = scmp.lt.s32.totalorder %s11, 3
    %p157 = pnand %p155, %p156
    %p158 = pneg %p157
    // Predicated region
    $region9: #{res50_forward.1} parent=5 // pred_check
      _
    $region10: #{res50_forward.1} parent=5 // pred_check_branch
      %160 = sbr.rel (%p157) target = $region12
    $region11: #{res50_forward.1} parent=5 // pred_region
      %s161 = ssub.s32 %s11, 1
      // Predicated region
      $region13: #{res50_forward.1} parent=11 // pred_check
        %p162 = pneg %p58
      $region14: #{res50_forward.1} parent=11 // pred_check_branch
        %164 = sbr.rel (%p162) target = $region16
      $region15: #{res50_forward.1} parent=11 // pred_region
        _
      $region16: #{res50_forward.1} parent=11 // pred_fallthru
        _
      // Predicated region
      $region17: #{res50_forward.1} parent=11 // pred_check
        %p165 = pneg %p79
      $region18: #{res50_forward.1} parent=11 // pred_check_branch
        %167 = sbr.rel (%p165) target = $region20
      $region19: #{res50_forward.1} parent=11 // pred_region
        _
      $region20: #{res50_forward.1} parent=11 // pred_fallthru
        _
      // Predicated region
      $region21: #{res50_forward.1} parent=11 // pred_check
        %p168 = pneg %p100
      $region22: #{res50_forward.1} parent=11 // pred_check_branch
        %170 = sbr.rel (%p168) target = $region24
      $region23: #{res50_forward.1} parent=11 // pred_region
        _
      $region24: #{res50_forward.1} parent=11 // pred_fallthru
        _
      // Predicated region
      $region25: #{res50_forward.1} parent=11 // pred_check
        %p171 = pneg %p121
      $region26: #{res50_forward.1} parent=11 // pred_check_branch
        %173 = sbr.rel (%p171) target = $region28
      $region27: #{res50_forward.1} parent=11 // pred_region
        _
      $region28: #{res50_forward.1} parent=11 // pred_fallthru
        _
    $region12: #{res50_forward.1} parent=5 // pred_fallthru
      _
    %p174 = scmp.lt.s32.totalorder %s11, 2
    // Predicated region
    $region29: #{res50_forward.1} parent=5 // pred_check
      %p175 = pneg %p174
    $region30: #{res50_forward.1} parent=5 // pred_check_branch
      %177 = sbr.rel (%p175) target = $region32
    $region31: #{res50_forward.1} parent=5 // pred_region
      // Predicated region
      $region33: #{res50_forward.1} parent=31 // pred_check
        %p178 = pneg %p31
      $region34: #{res50_forward.1} parent=31 // pred_check_branch
        %180 = sbr.rel (%p178) target = $region36
      $region35: #{res50_forward.1} parent=31 // pred_region
        %p181 = scmp.lt.s32.totalorder %s11, 1
        %s182 = scalar_select %p181, %s11, 1
        %s183 = smul.addr %s182, 4
        %s184 = smul.addr %s183, 4
        %s185 = scalar_lea.vmem %s0, %s184
      $region36: #{res50_forward.1} parent=31 // pred_fallthru
        _
    $region32: #{res50_forward.1} parent=5 // pred_fallthru
      _
    %p186 = scmp.le.s32.totalorder 1, %s11
    %p187 = scmp.lt.s32.totalorder %s11, 3
    %p188 = pnand %p186, %p187
    %p189 = pneg %p188
    // Predicated region
    $region37: #{res50_forward.1} parent=5 // pred_check
      _
    $region38: #{res50_forward.1} parent=5 // pred_check_branch
      %191 = sbr.rel (%p188) target = $region40
    $region39: #{res50_forward.1} parent=5 // pred_region
      %s192 = ssub.s32 %s11, 1
      %p193 = scmp.lt.s32.totalorder %s16, 1
      %s194 = scalar_select %p193, %s16, 1
      %s195 = smul.addr %s194, 4
      %s196 = smul.addr %s195, 4
      %s197 = scalar_lea.vmem %s0, %s196
      %p198 = pneg %p37
      %p199 = pneg %p34
      %p200 = pneg %p58
      %p201 = pneg %p55
      %p202 = pneg %p79
      %p203 = pneg %p76
      %p204 = pneg %p100
      %p205 = pneg %p97
      %p206 = pneg %p121
      %p207 = pneg %p118
      %p208 = pneg %p147
      %p209 = pneg %p144
      %p210 = scmp.lt.s32.totalorder %s16, 1
      %s211 = scalar_select %p210, %s16, 1
      %s212 = smul.addr %s211, 3
      %s213 = smul.addr %s212, 8
      %s214 = scalar_lea.vmem %s5, %s213
      %p215 = scmp.lt.s32.totalorder %s16, 1
      %s216 = scalar_select %p215, %s16, 1
      %s217 = smul.addr %s216, 4
      %s218 = smul.addr %s217, 4
      %s219 = scalar_lea.vmem %s0, %s218
      %p220 = scmp.lt.s32.totalorder %s16, 1
      %s221 = scalar_select %p220, %s16, 1
      %s222 = smul.addr %s221, 3
      %s223 = smul.addr %s222, 8
      %s224 = scalar_lea.vmem %s5, %s223
      %v226 = vlaneseq
      %vm227 = vcmp.ge.s32.totalorder %v226, 0
      %vm228 = vcmp.lt.s32.totalorder %v226, 324
      %vm229 = vmand %vm227, %vm228
      %230 = vst.msk [vmem:[#allocation2] ss:$8 sm:$0x7] %vm229, 1.0
      %231 = vst.msk [vmem:[#allocation2] ss:$8 sm:$0x0] %vm229, 1.0
      %v232 = vld [vmem:[%s4] sm:$0x7]
      %vm233 = vcmp.ne.f32.partialorder %v232, 0.0
      %v234 = vld [vmem:[%s219] sm:$0x77]
      %v235 = vld [vmem:[%s219 + $0x8] sm:$0x7]
      %v238 = vcombine.high %v234, %v234
      %v239 = vrot.slane %v234, 7
      %v240 = vrot.slane %v238, 7
      %v241 = vrot.slane %v235, 7
      %245 = vst [vmem:[#allocation2] sm:$0xe] %v239
      %246 = vst [vmem:[#allocation2 + $0x8] sm:$0xe] %v240
      %vm247 = vcmask 551937
      %248 = vst.msk [vmem:[#allocation2 + $0x10] sm:$0xe] %vm247, %v241
      %v249 = vld [vmem:[%s219] sm:$0x77]
      %v250 = vld [vmem:[%s219 + $0x8] sm:$0x7]
      %v253 = vcombine.low %v249, %v249
      %v254 = vcombine.low %v250, %v250
      %255 = vrot.lane.b32.xlu0 %v253, 127
      %v256 = vpop.permute.xlu0 %255
      %257 = vrot.lane.b32.xlu0 %v249, 127
      %v258 = vpop.permute.xlu0 %257
      %259 = vrot.lane.b32.xlu0 %v254, 127
      %v260 = vpop.permute.xlu0 %259
      %vm261 = vcmask 1039360
      %v262 = vsel %vm261, %v256, %v258
      %v263 = vsel %vm261, %v258, %v260
      %267 = vst [vmem:[#allocation2] sm:$0x70] %v262
      %268 = vst [vmem:[#allocation2 + $0x8] sm:$0x70] %v263
      %vm269 = vcmask 555012
      %270 = vst.msk [vmem:[#allocation2 + $0x10] sm:$0x70] %vm269, %v260
      %v271 = vld [vmem:[%s219] sm:$0x77]
      %v272 = vld [vmem:[%s219 + $0x8] sm:$0x7]
      %v275 = vcombine.high %v271, %v271
      %v276 = vrot.slane %v271, 1
      %v277 = vrot.slane %v275, 1
      %v278 = vrot.slane %v272, 1
      %279 = vrot.lane.b32.xlu0 %v276, 126
      %v280 = vpop.permute.xlu0 %279
      %281 = vrot.lane.b32.xlu0 %v277, 126
      %v282 = vpop.permute.xlu0 %281
      %283 = vrot.lane.b32.xlu0 %v278, 126
      %v284 = vpop.permute.xlu0 %283
      %vm285 = vcmask 1031168
      %v286 = vsel %vm285, %v280, %v282
      %v287 = vsel %vm285, %v282, %v284
      %291 = vst [vmem:[#allocation2] sm:$0x80] %v286
      %292 = vst [vmem:[#allocation2 + $0x8] sm:$0x80] %v287
      %vm293 = vcmask 556039
      %294 = vst.msk [vmem:[#allocation2 + $0x10] sm:$0x80] %vm293, %v284
      %295 = vst [vmem:[#allocation2 + $0x18] sm:$0x3] %v286
      %296 = vst [vmem:[#allocation2 + $0x20] sm:$0x3] %v287
      %vm297 = vcmask 549888
      %298 = vst.msk [vmem:[#allocation2 + $0x28] sm:$0x3] %vm297, %v284
      %v299 = vld [vmem:[%s219] sm:$0x77]
      %v300 = vld [vmem:[%s219 + $0x8] sm:$0x7]
      %v303 = vcombine.high %v299, %v299
      %v304 = vrot.slane %v299, 6
      %v305 = vrot.slane %v303, 6
      %v306 = vrot.slane %v300, 6
      %307 = vrot.lane.b32.xlu0 %v304, 110
      %v308 = vpop.permute.xlu0 %307
      %309 = vrot.lane.b32.xlu0 %v305, 110
      %v310 = vpop.permute.xlu0 %309
      %311 = vrot.lane.b32.xlu0 %v306, 110
      %v312 = vpop.permute.xlu0 %311
      %vm313 = vcmask 900096
      %v314 = vsel %vm313, %v308, %v310
      %v315 = vsel %vm313, %v310, %v312
      %319 = vst [vmem:[#allocation2 + $0x18] sm:$0x1c] %v314
      %320 = vst [vmem:[#allocation2 + $0x20] sm:$0x1c] %v315
      %vm321 = vcmask 552962
      %322 = vst.msk [vmem:[#allocation2 + $0x28] sm:$0x1c] %vm321, %v312
      %v323 = vld [vmem:[%s219] sm:$0x77]
      %v324 = vld [vmem:[%s219 + $0x8] sm:$0x7]
      %v327 = vcombine.high %v323, %v323
      %v328 = vrot.slane %v323, 3
      %v329 = vrot.slane %v327, 3
      %v330 = vrot.slane %v324, 3
      %331 = vrot.lane.b32.xlu0 %v328, 109
      %v332 = vpop.permute.xlu0 %331
      %333 = vrot.lane.b32.xlu0 %v329, 109
      %v334 = vpop.permute.xlu0 %333
      %335 = vrot.lane.b32.xlu0 %v330, 109
      %v336 = vpop.permute.xlu0 %335
      %vm337 = vcmask 891904
      %v338 = vsel %vm337, %v332, %v334
      %v339 = vsel %vm337, %v334, %v336
      %343 = vst [vmem:[#allocation2 + $0x18] sm:$0xe0] %v338
      %344 = vst [vmem:[#allocation2 + $0x20] sm:$0xe0] %v339
      %vm345 = vcmask 556037
      %346 = vst.msk [vmem:[#allocation2 + $0x28] sm:$0xe0] %vm345, %v336
      %v347 = vld [vmem:[%s219] sm:$0x77]
      %v348 = vld [vmem:[%s219 + $0x8] sm:$0x7]
      %v351 = vcombine.high %v347, %v347
      %352 = vrot.lane.b32.xlu0 %v347, 108
      %v353 = vpop.permute.xlu0 %352
      %354 = vrot.lane.b32.xlu0 %v351, 108
      %v355 = vpop.permute.xlu0 %354
      %356 = vrot.lane.b32.xlu0 %v348, 108
      %v357 = vpop.permute.xlu0 %356
      %vm358 = vcmask 883712
      %v359 = vsel %vm358, %v353, %v355
      %v360 = vsel %vm358, %v355, %v357
      %364 = vst [vmem:[#allocation2 + $0x30] sm:$0x7] %v359
      %365 = vst [vmem:[#allocation2 + $0x38] sm:$0x7] %v360
      %vm366 = vcmask 550912
      %367 = vst.msk [vmem:[#allocation2 + $0x40] sm:$0x7] %vm366, %v357
      %v368 = vld [vmem:[%s219] sm:$0x77]
      %v369 = vld [vmem:[%s219 + $0x8] sm:$0x7]
      %v372 = vcombine.high %v368, %v368
      %v373 = vrot.slane %v368, 5
      %v374 = vrot.slane %v372, 5
      %v375 = vrot.slane %v369, 5
      %376 = vrot.lane.b32.xlu0 %v373, 92
      %v377 = vpop.permute.xlu0 %376
      %378 = vrot.lane.b32.xlu0 %v374, 92
      %v379 = vpop.permute.xlu0 %378
      %380 = vrot.lane.b32.xlu0 %v375, 92
      %v381 = vpop.permute.xlu0 %380
      %vm382 = vcmask 752640
      %v383 = vsel %vm382, %v377, %v379
      %v384 = vsel %vm382, %v379, %v381
      %388 = vst [vmem:[#allocation2 + $0x30] sm:$0x38] %v383
      %389 = vst [vmem:[#allocation2 + $0x38] sm:$0x38] %v384
      %vm390 = vcmask 553987
      %391 = vst.msk [vmem:[#allocation2 + $0x40] sm:$0x38] %vm390, %v381
      %v392 = vld [vmem:[%s219] sm:$0x77]
      %v393 = vld [vmem:[%s219 + $0x8] sm:$0x7]
      %v396 = vcombine.high %v392, %v392
      %v397 = vrot.slane %v392, 2
      %v398 = vrot.slane %v396, 2
      %v399 = vrot.slane %v393, 2
      %400 = vrot.lane.b32.xlu0 %v397, 91
      %v401 = vpop.permute.xlu0 %400
      %402 = vrot.lane.b32.xlu0 %v398, 91
      %v403 = vpop.permute.xlu0 %402
      %404 = vrot.lane.b32.xlu0 %v399, 91
      %v405 = vpop.permute.xlu0 %404
      %vm406 = vcmask 744448
      %v407 = vsel %vm406, %v401, %v403
      %v408 = vsel %vm406, %v403, %v405
      %412 = vst [vmem:[#allocation2 + $0x30] sm:$0xc0] %v407
      %413 = vst [vmem:[#allocation2 + $0x38] sm:$0xc0] %v408
      %vm414 = vcmask 556038
      %415 = vst.msk [vmem:[#allocation2 + $0x40] sm:$0xc0] %vm414, %v405
      %416 = vst [vmem:[#allocation2 + $0x48] sm:$0x1] %v407
      %417 = vst [vmem:[#allocation2 + $0x50] sm:$0x1] %v408
      %vm418 = vcmask 548864
      %419 = vst.msk [vmem:[#allocation2 + $0x58] sm:$0x1] %vm418, %v405
      %v420 = vld [vmem:[%s219] sm:$0x77]
      %v421 = vld [vmem:[%s219 + $0x8] sm:$0x7]
      %v424 = vcombine.high %v420, %v420
      %v425 = vrot.slane %v420, 7
      %v426 = vrot.slane %v424, 7
      %v427 = vrot.slane %v421, 7
      %428 = vrot.lane.b32.xlu0 %v425, 90
      %v429 = vpop.permute.xlu0 %428
      %430 = vrot.lane.b32.xlu0 %v426, 90
      %v431 = vpop.permute.xlu0 %430
      %432 = vrot.lane.b32.xlu0 %v427, 90
      %v433 = vpop.permute.xlu0 %432
      %vm434 = vcmask 736256
      %v435 = vsel %vm434, %v429, %v431
      %v436 = vsel %vm434, %v431, %v433
      %440 = vst [vmem:[#allocation2 + $0x48] sm:$0xe] %v435
      %441 = vst [vmem:[#allocation2 + $0x50] sm:$0xe] %v436
      %442 = vst.msk [vmem:[#allocation2 + $0x58] sm:$0xe] %vm247, %v433
      %v443 = vld [vmem:[%s1] sm:$0x7]
      %v444 = vld [vmem:[#allocation2] sm:$0xff]
      %v445 = vld [vmem:[#allocation2 + $0x8] sm:$0xff]
      %v446 = vld [vmem:[#allocation2 + $0x10] sm:$0xff]
      %v447 = vld [vmem:[#allocation2 + $0x18] sm:$0xff]
      %v448 = vld [vmem:[#allocation2 + $0x20] sm:$0xff]
      %v449 = vld [vmem:[#allocation2 + $0x28] sm:$0xff]
      %v450 = vld [vmem:[#allocation2 + $0x30] sm:$0xff]
      %v451 = vld [vmem:[#allocation2 + $0x38] sm:$0xff]
      %v452 = vld [vmem:[#allocation2 + $0x40] sm:$0xff]
      %v453 = vld [vmem:[#allocation2 + $0x48] sm:$0xf]
      %v454 = vld [vmem:[#allocation2 + $0x50] sm:$0xf]
      %v455 = vld [vmem:[#allocation2 + $0x58] sm:$0xf]
      %v456 = vpack.c.bf16 %v447, %v444
      %v457 = vpack.c.bf16 %v448, %v445
      %v458 = vpack.c.bf16 %v449, %v446
      %v459 = vpack.c.bf16 %v453, %v450
      %v460 = vpack.c.bf16 %v454, %v451
      %v461 = vpack.c.bf16 %v455, %v452
      %vm462 = vcmask 228352
      %v464 = vsel %vm462, %v443, 0
      %vm466 = vcmask 1045504
      %v468 = vsel %vm466, %v459, 0
      %v471 = vsel %vm466, %v460, 0
      %v474 = vsel %vm466, %v461, 0
      %476 = vmatprep.subr.bf16.mxu0 %v457
      %477 = vmatpush1.bf16.msra.mxu0 %v456
      %478 = vmatprep.subr.bf16.mxu0 %v471
      %479 = vmatpush1.bf16.msra.mxu0 %v468
      %480 = vmatprep.subr.bf16.mxu0 0
      %481 = vmatpush1.bf16.msra.mxu0 0
      %482 = vmatprep.subr.bf16.mxu0 0
      %483 = vmatpush1.bf16.msra.mxu0 0
      %484 = vmatprep.subr.bf16.mxu0 0
      %485 = vmatpush1.bf16.msra.mxu0 0
      %486 = vmatprep.subr.bf16.mxu0 0
      %487 = vmatpush1.bf16.msra.mxu0 0
      %488 = vmatprep.subr.bf16.mxu0 0
      %489 = vmatpush1.bf16.msra.mxu0 0
      %490 = vmatprep.subr.bf16.mxu0 0
      %491 = vmatpush1.bf16.msra.mxu0 0
      %492 = vmatprep.subr.bf16.mxu0 0
      %493 = vmatpush1.bf16.msra.mxu0 0
      %494 = vmatprep.subr.bf16.mxu0 0
      %495 = vmatpush1.bf16.msra.mxu0 0
      %496 = vmatprep.subr.bf16.mxu0 0
      %497 = vmatpush1.bf16.msra.mxu0 0
      %498 = vmatprep.subr.bf16.mxu0 0
      %499 = vmatpush1.bf16.msra.mxu0 0
      %500 = vmatprep.subr.bf16.mxu0 0
      %501 = vmatpush1.bf16.msra.mxu0 0
      %502 = vmatprep.subr.bf16.mxu0 0
      %503 = vmatpush1.bf16.msra.mxu0 0
      %504 = vmatprep.subr.bf16.mxu0 0
      %505 = vmatpush1.bf16.msra.mxu0 0
      %506 = vmatprep.subr.bf16.mxu0 0
      %507 = vmatpush1.bf16.msra.mxu0 0
      %508 = vmatprep.mubr.bf16.mxu0 0
      %509 = vmatmul.mubr.bf16.gmra.mrb[0].mxu0 %v464
      %v510 = vpop.f32.mrb[0].mxu0
      %v511 = vadd.f32 0.0, %v510
      %v512 = vpop.f32.mrb[0].mxu0
      %v513 = vadd.f32 0.0, %v512
      %v514 = vpop.f32.mrb[0].mxu0
      %v515 = vpop.f32.mrb[0].mxu0
      %516 = vdwg.mxu0
      %517 = vmatprep.subr.bf16.mxu0 0
      %518 = vmatpush1.bf16.msra.mxu0 %v458
      %519 = vmatprep.subr.bf16.mxu0 0
      %520 = vmatpush1.bf16.msra.mxu0 %v474
      %521 = vmatprep.subr.bf16.mxu0 0
      %522 = vmatpush1.bf16.msra.mxu0 0
      %523 = vmatprep.subr.bf16.mxu0 0
      %524 = vmatpush1.bf16.msra.mxu0 0
      %525 = vmatprep.subr.bf16.mxu0 0
      %526 = vmatpush1.bf16.msra.mxu0 0
      %527 = vmatprep.subr.bf16.mxu0 0
      %528 = vmatpush1.bf16.msra.mxu0 0
      %529 = vmatprep.subr.bf16.mxu0 0
      %530 = vmatpush1.bf16.msra.mxu0 0
      %531 = vmatprep.subr.bf16.mxu0 0
      %532 = vmatpush1.bf16.msra.mxu0 0
      %533 = vmatprep.subr.bf16.mxu0 0
      %534 = vmatpush1.bf16.msra.mxu0 0
      %535 = vmatprep.subr.bf16.mxu0 0
      %536 = vmatpush1.bf16.msra.mxu0 0
      %537 = vmatprep.subr.bf16.mxu0 0
      %538 = vmatpush1.bf16.msra.mxu0 0
      %539 = vmatprep.subr.bf16.mxu0 0
      %540 = vmatpush1.bf16.msra.mxu0 0
      %541 = vmatprep.subr.bf16.mxu0 0
      %542 = vmatpush1.bf16.msra.mxu0 0
      %543 = vmatprep.subr.bf16.mxu0 0
      %544 = vmatpush1.bf16.msra.mxu0 0
      %545 = vmatprep.subr.bf16.mxu0 0
      %546 = vmatpush1.bf16.msra.mxu0 0
      %547 = vmatprep.subr.bf16.mxu0 0
      %548 = vmatpush1.bf16.msra.mxu0 0
      %549 = vmatprep.mubr.bf16.mxu0 0
      %550 = vmatmul.mubr.bf16.gmra.mrb[0].mxu0 %v464
      %v551 = vpop.f32.mrb[0].mxu0
      %v552 = vadd.f32 0.0, %v551
      %v553 = vpop.f32.mrb[0].mxu0
      %v554 = vpop.f32.mrb[0].mxu0
      %v555 = vpop.f32.mrb[0].mxu0
      %556 = vdwg.mxu0
      %v557 = vmax.f32 %v511, 0.0
      %v558 = vmax.f32 %v513, 0.0
      %v559 = vmax.f32 %v552, 0.0
      %v560 = vsel %vm233, 1, 0
      %v561 = vlaneseq
      %v562 = vshrl.u32 %v561, 7
      %v563 = vsub.s32 0, %v562
      %v564 = vrot.slane %v560, %v563
      %v565 = vlaneseq
      %v566 = vshrl.u32 %v565, 7
      %v567 = vsub.s32 1, %v566
      %v568 = vrot.slane %v560, %v567
      %v569 = vlaneseq
      %v570 = vshrl.u32 %v569, 7
      %v571 = vsub.s32 2, %v570
      %v572 = vrot.slane %v560, %v571
      %vm573 = vcmp.eq.s32.totalorder %v564, 1
      %vm574 = vcmp.eq.s32.totalorder %v568, 1
      %vm575 = vcmp.eq.s32.totalorder %v572, 1
      %v576 = vsel %vm573, %v557, 0.0
      %v577 = vsel %vm574, %v558, 0.0
      %v578 = vsel %vm575, %v559, 0.0
      %vm579 = vcmask 151552
      %580 = vst.msk [vmem:[#allocation3] sm:$0x1f] %vm579, 0.0
      %584 = vrot.lane.b32.xlu0 %v576, 19
      %v585 = vpop.permute.xlu0 %584
      %586 = vrot.lane.b32.xlu0 %v577, 19
      %v587 = vpop.permute.xlu0 %586
      %588 = vrot.lane.b32.xlu0 %v578, 19
      %v589 = vpop.permute.xlu0 %588
      %vm590 = vcmask 154624
      %v591 = vsel %vm590, %v585, %v587
      %v592 = vsel %vm590, %v587, %v589
      %vm596 = vcmask 1044632
      %597 = vst.msk [vmem:[#allocation3] sm:$0x1f] %vm596, %v585
      %598 = vst [vmem:[#allocation3 + $0x8] sm:$0x1f] %v591
      %vm599 = vcmask 708608
      %600 = vst.msk [vmem:[#allocation3 + $0x10] sm:$0x1f] %vm599, %v592
      %v601 = vld [vmem:[#allocation3] sm:$0x1f]
      %v602 = vld [vmem:[#allocation3 + $0x8] sm:$0x1f]
      %v603 = vld [vmem:[#allocation3 + $0x10] sm:$0x1f]
      %v607 = vrot.slane %v601, 7
      %v608 = vrot.slane %v602, 7
      %v609 = vrot.slane %v603, 7
      %613 = vst [vmem:[#allocation2] sm:$0x3e] %v607
      %614 = vst [vmem:[#allocation2 + $0x8] sm:$0x3e] %v608
      %vm615 = vcmask 553985
      %616 = vst.msk [vmem:[#allocation2 + $0x10] sm:$0x3e] %vm615, %v609
      %v617 = vld [vmem:[#allocation3] sm:$0x1f]
      %v618 = vld [vmem:[#allocation3 + $0x8] sm:$0x1f]
      %v619 = vld [vmem:[#allocation3 + $0x10] sm:$0x1f]
      %v623 = vrot.slane %v617, 2
      %v624 = vrot.slane %v618, 2
      %v625 = vrot.slane %v619, 2
      %626 = vrot.lane.b32.xlu0 %v623, 127
      %v627 = vpop.permute.xlu0 %626
      %628 = vrot.lane.b32.xlu0 %v624, 127
      %v629 = vpop.permute.xlu0 %628
      %630 = vrot.lane.b32.xlu0 %v625, 127
      %v631 = vpop.permute.xlu0 %630
      %v632 = vsel %vm261, %v627, %v629
      %v633 = vsel %vm261, %v629, %v631
      %637 = vst [vmem:[#allocation2] sm:$0xc0] %v632
      %638 = vst [vmem:[#allocation2 + $0x8] sm:$0xc0] %v633
      %639 = vst.msk [vmem:[#allocation2 + $0x10] sm:$0xc0] %vm414, %v631
      %640 = vst [vmem:[#allocation2 + $0x18] sm:$0x7] %v632
      %641 = vst [vmem:[#allocation2 + $0x20] sm:$0x7] %v633
      %642 = vst.msk [vmem:[#allocation2 + $0x28] sm:$0x7] %vm366, %v631
      %v643 = vld [vmem:[#allocation3] sm:$0x1f]
      %v644 = vld [vmem:[#allocation3 + $0x8] sm:$0x1f]
      %v645 = vld [vmem:[#allocation3 + $0x10] sm:$0x1f]
      %v649 = vrot.slane %v643, 5
      %v650 = vrot.slane %v644, 5
      %v651 = vrot.slane %v645, 5
      %652 = vrot.lane.b32.xlu0 %v649, 126
      %v653 = vpop.permute.xlu0 %652
      %654 = vrot.lane.b32.xlu0 %v650, 126
      %v655 = vpop.permute.xlu0 %654
      %656 = vrot.lane.b32.xlu0 %v651, 126
      %v657 = vpop.permute.xlu0 %656
      %v658 = vsel %vm285, %v653, %v655
      %v659 = vsel %vm285, %v655, %v657
      %663 = vst [vmem:[#allocation2 + $0x18] sm:$0xf8] %v658
      %664 = vst [vmem:[#allocation2 + $0x20] sm:$0xf8] %v659
      %vm665 = vcmask 556035
      %666 = vst.msk [vmem:[#allocation2 + $0x28] sm:$0xf8] %vm665, %v657
      %v667 = vld [vmem:[#allocation3] sm:$0x1f]
      %v668 = vld [vmem:[#allocation3 + $0x8] sm:$0x1f]
      %v669 = vld [vmem:[#allocation3 + $0x10] sm:$0x1f]
      %673 = vrot.lane.b32.xlu0 %v667, 110
      %v674 = vpop.permute.xlu0 %673
      %675 = vrot.lane.b32.xlu0 %v668, 110
      %v676 = vpop.permute.xlu0 %675
      %677 = vrot.lane.b32.xlu0 %v669, 110
      %v678 = vpop.permute.xlu0 %677
      %v679 = vsel %vm313, %v674, %v676
      %v680 = vsel %vm313, %v676, %v678
      %684 = vst [vmem:[#allocation2 + $0x30] sm:$0x1f] %v679
      %685 = vst [vmem:[#allocation2 + $0x38] sm:$0x1f] %v680
      %vm686 = vcmask 552960
      %687 = vst.msk [vmem:[#allocation2 + $0x40] sm:$0x1f] %vm686, %v678
      %v688 = vld [vmem:[#allocation3] sm:$0x1f]
      %v689 = vld [vmem:[#allocation3 + $0x8] sm:$0x1f]
      %v690 = vld [vmem:[#allocation3 + $0x10] sm:$0x1f]
      %v694 = vrot.slane %v688, 3
      %v695 = vrot.slane %v689, 3
      %v696 = vrot.slane %v690, 3
      %697 = vrot.lane.b32.xlu0 %v694, 109
      %v698 = vpop.permute.xlu0 %697
      %699 = vrot.lane.b32.xlu0 %v695, 109
      %v700 = vpop.permute.xlu0 %699
      %701 = vrot.lane.b32.xlu0 %v696, 109
      %v702 = vpop.permute.xlu0 %701
      %v703 = vsel %vm337, %v698, %v700
      %v704 = vsel %vm337, %v700, %v702
      %708 = vst [vmem:[#allocation2 + $0x30] sm:$0xe0] %v703
      %709 = vst [vmem:[#allocation2 + $0x38] sm:$0xe0] %v704
      %710 = vst.msk [vmem:[#allocation2 + $0x40] sm:$0xe0] %vm345, %v702
      %711 = vst [vmem:[#allocation2 + $0x48] sm:$0x3] %v703
      %712 = vst [vmem:[#allocation2 + $0x50] sm:$0x3] %v704
      %713 = vst.msk [vmem:[#allocation2 + $0x58] sm:$0x3] %vm297, %v702
      %v714 = vld [vmem:[#allocation3] sm:$0x1f]
      %v715 = vld [vmem:[#allocation3 + $0x8] sm:$0x1f]
      %v716 = vld [vmem:[#allocation3 + $0x10] sm:$0x1f]
      %v720 = vrot.slane %v714, 6
      %v721 = vrot.slane %v715, 6
      %v722 = vrot.slane %v716, 6
      %723 = vrot.lane.b32.xlu0 %v720, 108
      %v724 = vpop.permute.xlu0 %723
      %725 = vrot.lane.b32.xlu0 %v721, 108
      %v726 = vpop.permute.xlu0 %725
      %727 = vrot.lane.b32.xlu0 %v722, 108
      %v728 = vpop.permute.xlu0 %727
      %v729 = vsel %vm358, %v724, %v726
      %v730 = vsel %vm358, %v726, %v728
      %734 = vst [vmem:[#allocation2 + $0x48] sm:$0x7c] %v729
      %735 = vst [vmem:[#allocation2 + $0x50] sm:$0x7c] %v730
      %vm736 = vcmask 555010
      %737 = vst.msk [vmem:[#allocation2 + $0x58] sm:$0x7c] %vm736, %v728
      %v738 = vld [vmem:[#allocation3] sm:$0x1f]
      %v739 = vld [vmem:[#allocation3 + $0x8] sm:$0x1f]
      %v740 = vld [vmem:[#allocation3 + $0x10] sm:$0x1f]
      %v744 = vrot.slane %v738, 1
      %v745 = vrot.slane %v739, 1
      %v746 = vrot.slane %v740, 1
      %747 = vrot.lane.b32.xlu0 %v744, 92
      %v748 = vpop.permute.xlu0 %747
      %749 = vrot.lane.b32.xlu0 %v745, 92
      %v750 = vpop.permute.xlu0 %749
      %751 = vrot.lane.b32.xlu0 %v746, 92
      %v752 = vpop.permute.xlu0 %751
      %v753 = vsel %vm382, %v748, %v750
      %v754 = vsel %vm382, %v750, %v752
      %758 = vst [vmem:[#allocation2 + $0x48] sm:$0x80] %v753
      %759 = vst [vmem:[#allocation2 + $0x50] sm:$0x80] %v754
      %760 = vst.msk [vmem:[#allocation2 + $0x58] sm:$0x80] %vm293, %v752
      %761 = vst [vmem:[#allocation2 + $0x60] sm:$0xf] %v753
      %762 = vst [vmem:[#allocation2 + $0x68] sm:$0xf] %v754
      %vm763 = vcmask 551936
      %764 = vst.msk [vmem:[#allocation2 + $0x70] sm:$0xf] %vm763, %v752
      %v765 = vld [vmem:[#allocation3] sm:$0x1f]
      %v766 = vld [vmem:[#allocation3 + $0x8] sm:$0x1f]
      %v767 = vld [vmem:[#allocation3 + $0x10] sm:$0x1f]
      %v771 = vrot.slane %v765, 4
      %v772 = vrot.slane %v766, 4
      %v773 = vrot.slane %v767, 4
      %774 = vrot.lane.b32.xlu0 %v771, 91
      %v775 = vpop.permute.xlu0 %774
      %776 = vrot.lane.b32.xlu0 %v772, 91
      %v777 = vpop.permute.xlu0 %776
      %778 = vrot.lane.b32.xlu0 %v773, 91
      %v779 = vpop.permute.xlu0 %778
      %v780 = vsel %vm406, %v775, %v777
      %v781 = vsel %vm406, %v777, %v779
      %785 = vst [vmem:[#allocation2 + $0x60] sm:$0xf0] %v780
      %786 = vst [vmem:[#allocation2 + $0x68] sm:$0xf0] %v781
      %vm787 = vcmask 556036
      %788 = vst.msk [vmem:[#allocation2 + $0x70] sm:$0xf0] %vm787, %v779
      %789 = vst [vmem:[#allocation2 + $0x78] sm:$0x1] %v780
      %790 = vst [vmem:[#allocation2 + $0x80] sm:$0x1] %v781
      %791 = vst.msk [vmem:[#allocation2 + $0x88] sm:$0x1] %vm418, %v779
      %v792 = vld [vmem:[#allocation3] sm:$0x1f]
      %v793 = vld [vmem:[#allocation3 + $0x8] sm:$0x1f]
      %v794 = vld [vmem:[#allocation3 + $0x10] sm:$0x1f]
      %v798 = vrot.slane %v792, 7
      %v799 = vrot.slane %v793, 7
      %v800 = vrot.slane %v794, 7
      %801 = vrot.lane.b32.xlu0 %v798, 90
      %v802 = vpop.permute.xlu0 %801
      %803 = vrot.lane.b32.xlu0 %v799, 90
      %v804 = vpop.permute.xlu0 %803
      %805 = vrot.lane.b32.xlu0 %v800, 90
      %v806 = vpop.permute.xlu0 %805
      %v807 = vsel %vm434, %v802, %v804
      %v808 = vsel %vm434, %v804, %v806
      %812 = vst [vmem:[#allocation2 + $0x78] sm:$0x3e] %v807
      %813 = vst [vmem:[#allocation2 + $0x80] sm:$0x3e] %v808
      %814 = vst.msk [vmem:[#allocation2 + $0x88] sm:$0x3e] %vm615, %v806
      %v815 = vld [vmem:[%s2] sm:$0x7]
      %v816 = vld [vmem:[#allocation2] sm:$0xff]
      %v817 = vld [vmem:[#allocation2 + $0x8] sm:$0xff]
      %v818 = vld [vmem:[#allocation2 + $0x10] sm:$0xff]
      %v819 = vld [vmem:[#allocation2 + $0x18] sm:$0xff]
      %v820 = vld [vmem:[#allocation2 + $0x20] sm:$0xff]
      %v821 = vld [vmem:[#allocation2 + $0x28] sm:$0xff]
      %v822 = vld [vmem:[#allocation2 + $0x30] sm:$0xff]
      %v823 = vld [vmem:[#allocation2 + $0x38] sm:$0xff]
      %v824 = vld [vmem:[#allocation2 + $0x40] sm:$0xff]
      %v825 = vld [vmem:[#allocation2 + $0x48] sm:$0xff]
      %v826 = vld [vmem:[#allocation2 + $0x50] sm:$0xff]
      %v827 = vld [vmem:[#allocation2 + $0x58] sm:$0xff]
      %v828 = vld [vmem:[#allocation2 + $0x60] sm:$0xff]
      %v829 = vld [vmem:[#allocation2 + $0x68] sm:$0xff]
      %v830 = vld [vmem:[#allocation2 + $0x70] sm:$0xff]
      %v831 = vld [vmem:[#allocation2 + $0x78] sm:$0x3f]
      %v832 = vld [vmem:[#allocation2 + $0x80] sm:$0x3f]
      %v833 = vld [vmem:[#allocation2 + $0x88] sm:$0x3f]
      %v834 = vpack.c.bf16 %v819, %v816
      %v835 = vpack.c.bf16 %v820, %v817
      %v836 = vpack.c.bf16 %v821, %v818
      %v837 = vpack.c.bf16 %v825, %v822
      %v838 = vpack.c.bf16 %v826, %v823
      %v839 = vpack.c.bf16 %v827, %v824
      %v840 = vpack.c.bf16 %v831, %v828
      %v841 = vpack.c.bf16 %v832, %v829
      %v842 = vpack.c.bf16 %v833, %v830
      %vm843 = vcmask 375808
      %v845 = vsel %vm843, %v815, 0
      %vm847 = vcmask 1046528
      %v849 = vsel %vm847, %v840, 0
      %v852 = vsel %vm847, %v841, 0
      %v855 = vsel %vm847, %v842, 0
      %857 = vmatprep.subr.bf16.mxu0 %v835
      %858 = vmatpush1.bf16.msra.mxu0 %v834
      %859 = vmatprep.subr.bf16.mxu0 %v838
      %860 = vmatpush1.bf16.msra.mxu0 %v837
      %861 = vmatprep.subr.bf16.mxu0 %v852
      %862 = vmatpush1.bf16.msra.mxu0 %v849
      %863 = vmatprep.subr.bf16.mxu0 0
      %864 = vmatpush1.bf16.msra.mxu0 0
      %865 = vmatprep.subr.bf16.mxu0 0
      %866 = vmatpush1.bf16.msra.mxu0 0
      %867 = vmatprep.subr.bf16.mxu0 0
      %868 = vmatpush1.bf16.msra.mxu0 0
      %869 = vmatprep.subr.bf16.mxu0 0
      %870 = vmatpush1.bf16.msra.mxu0 0
      %871 = vmatprep.subr.bf16.mxu0 0
      %872 = vmatpush1.bf16.msra.mxu0 0
      %873 = vmatprep.subr.bf16.mxu0 0
      %874 = vmatpush1.bf16.msra.mxu0 0
      %875 = vmatprep.subr.bf16.mxu0 0
      %876 = vmatpush1.bf16.msra.mxu0 0
      %877 = vmatprep.subr.bf16.mxu0 0
      %878 = vmatpush1.bf16.msra.mxu0 0
      %879 = vmatprep.subr.bf16.mxu0 0
      %880 = vmatpush1.bf16.msra.mxu0 0
      %881 = vmatprep.subr.bf16.mxu0 0
      %882 = vmatpush1.bf16.msra.mxu0 0
      %883 = vmatprep.subr.bf16.mxu0 0
      %884 = vmatpush1.bf16.msra.mxu0 0
      %885 = vmatprep.subr.bf16.mxu0 0
      %886 = vmatpush1.bf16.msra.mxu0 0
      %887 = vmatprep.subr.bf16.mxu0 0
      %888 = vmatpush1.bf16.msra.mxu0 0
      %889 = vmatprep.mubr.bf16.mxu0 0
      %890 = vmatmul.mubr.bf16.gmra.mrb[0].mxu0 %v845
      %v891 = vpop.f32.mrb[0].mxu0
      %v892 = vadd.f32 0.0, %v891
      %v893 = vpop.f32.mrb[0].mxu0
      %v894 = vadd.f32 0.0, %v893
      %v895 = vpop.f32.mrb[0].mxu0
      %v896 = vpop.f32.mrb[0].mxu0
      %897 = vdwg.mxu0
      %898 = vmatprep.subr.bf16.mxu0 0
      %899 = vmatpush1.bf16.msra.mxu0 %v836
      %900 = vmatprep.subr.bf16.mxu0 0
      %901 = vmatpush1.bf16.msra.mxu0 %v839
      %902 = vmatprep.subr.bf16.mxu0 0
      %903 = vmatpush1.bf16.msra.mxu0 %v855
      %904 = vmatprep.subr.bf16.mxu0 0
      %905 = vmatpush1.bf16.msra.mxu0 0
      %906 = vmatprep.subr.bf16.mxu0 0
      %907 = vmatpush1.bf16.msra.mxu0 0
      %908 = vmatprep.subr.bf16.mxu0 0
      %909 = vmatpush1.bf16.msra.mxu0 0
      %910 = vmatprep.subr.bf16.mxu0 0
      %911 = vmatpush1.bf16.msra.mxu0 0
      %912 = vmatprep.subr.bf16.mxu0 0
      %913 = vmatpush1.bf16.msra.mxu0 0
      %914 = vmatprep.subr.bf16.mxu0 0
      %915 = vmatpush1.bf16.msra.mxu0 0
      %916 = vmatprep.subr.bf16.mxu0 0
      %917 = vmatpush1.bf16.msra.mxu0 0
      %918 = vmatprep.subr.bf16.mxu0 0
      %919 = vmatpush1.bf16.msra.mxu0 0
      %920 = vmatprep.subr.bf16.mxu0 0
      %921 = vmatpush1.bf16.msra.mxu0 0
      %922 = vmatprep.subr.bf16.mxu0 0
      %923 = vmatpush1.bf16.msra.mxu0 0
      %924 = vmatprep.subr.bf16.mxu0 0
      %925 = vmatpush1.bf16.msra.mxu0 0
      %926 = vmatprep.subr.bf16.mxu0 0
      %927 = vmatpush1.bf16.msra.mxu0 0
      %928 = vmatprep.subr.bf16.mxu0 0
      %929 = vmatpush1.bf16.msra.mxu0 0
      %930 = vmatprep.mubr.bf16.mxu0 0
      %931 = vmatmul.mubr.bf16.gmra.mrb[0].mxu0 %v845
      %v932 = vpop.f32.mrb[0].mxu0
      %v933 = vadd.f32 0.0, %v932
      %v934 = vpop.f32.mrb[0].mxu0
      %v935 = vpop.f32.mrb[0].mxu0
      %v936 = vpop.f32.mrb[0].mxu0
      %937 = vdwg.mxu0
      %v938 = vmax.f32 %v892, 0.0
      %v939 = vmax.f32 %v894, 0.0
      %v940 = vmax.f32 %v933, 0.0
      %v941 = vsel %vm573, %v938, 0.0
      %v942 = vsel %vm574, %v939, 0.0
      %v943 = vsel %vm575, %v940, 0.0
      %944 = vst.msk [vmem:[#allocation4] sm:$0x1f] %vm579, 0.0
      %948 = vrot.lane.b32.xlu0 %v941, 19
      %v949 = vpop.permute.xlu0 %948
      %950 = vrot.lane.b32.xlu0 %v942, 19
      %v951 = vpop.permute.xlu0 %950
      %952 = vrot.lane.b32.xlu0 %v943, 19
      %v953 = vpop.permute.xlu0 %952
      %v954 = vsel %vm590, %v949, %v951
      %v955 = vsel %vm590, %v951, %v953
      %959 = vst.msk [vmem:[#allocation4] sm:$0x1f] %vm596, %v949
      %960 = vst [vmem:[#allocation4 + $0x8] sm:$0x1f] %v954
      %961 = vst.msk [vmem:[#allocation4 + $0x10] sm:$0x1f] %vm599, %v955
      %v962 = vld [vmem:[#allocation4] sm:$0x1f]
      %v963 = vld [vmem:[#allocation4 + $0x8] sm:$0x1f]
      %v964 = vld [vmem:[#allocation4 + $0x10] sm:$0x1f]
      %v968 = vrot.slane %v962, 7
      %v969 = vrot.slane %v963, 7
      %v970 = vrot.slane %v964, 7
      %971 = vrot.lane.b32.xlu0 %v968, 109
      %v972 = vpop.permute.xlu0 %971
      %973 = vrot.lane.b32.xlu0 %v969, 109
      %v974 = vpop.permute.xlu0 %973
      %975 = vrot.lane.b32.xlu0 %v970, 109
      %v976 = vpop.permute.xlu0 %975
      %v977 = vsel %vm337, %v972, %v974
      %v978 = vsel %vm337, %v974, %v976
      %982 = vst [vmem:[#allocation2] sm:$0x3e] %v977
      %983 = vst [vmem:[#allocation2 + $0x8] sm:$0x3e] %v978
      %984 = vst.msk [vmem:[#allocation2 + $0x10] sm:$0x3e] %vm615, %v976
      %v985 = vld [vmem:[#allocation4] sm:$0x1f]
      %v986 = vld [vmem:[#allocation4 + $0x8] sm:$0x1f]
      %v987 = vld [vmem:[#allocation4 + $0x10] sm:$0x1f]
      %v991 = vrot.slane %v985, 2
      %v992 = vrot.slane %v986, 2
      %v993 = vrot.slane %v987, 2
      %994 = vrot.lane.b32.xlu0 %v991, 108
      %v995 = vpop.permute.xlu0 %994
      %996 = vrot.lane.b32.xlu0 %v992, 108
      %v997 = vpop.permute.xlu0 %996
      %998 = vrot.lane.b32.xlu0 %v993, 108
      %v999 = vpop.permute.xlu0 %998
      %v1000 = vsel %vm358, %v995, %v997
      %v1001 = vsel %vm358, %v997, %v999
      %1005 = vst [vmem:[#allocation2] sm:$0xc0] %v1000
      %1006 = vst [vmem:[#allocation2 + $0x8] sm:$0xc0] %v1001
      %1007 = vst.msk [vmem:[#allocation2 + $0x10] sm:$0xc0] %vm414, %v999
      %1008 = vst [vmem:[#allocation2 + $0x18] sm:$0x7] %v1000
      %1009 = vst [vmem:[#allocation2 + $0x20] sm:$0x7] %v1001
      %1010 = vst.msk [vmem:[#allocation2 + $0x28] sm:$0x7] %vm366, %v999
      %v1011 = vld [vmem:[#allocation4] sm:$0x1f]
      %v1012 = vld [vmem:[#allocation4 + $0x8] sm:$0x1f]
      %v1013 = vld [vmem:[#allocation4 + $0x10] sm:$0x1f]
      %v1017 = vrot.slane %v1011, 5
      %v1018 = vrot.slane %v1012, 5
      %v1019 = vrot.slane %v1013, 5
      %1020 = vrot.lane.b32.xlu0 %v1017, 107
      %v1021 = vpop.permute.xlu0 %1020
      %1022 = vrot.lane.b32.xlu0 %v1018, 107
      %v1023 = vpop.permute.xlu0 %1022
      %1024 = vrot.lane.b32.xlu0 %v1019, 107
      %v1025 = vpop.permute.xlu0 %1024
      %vm1026 = vcmask 875520
      %v1027 = vsel %vm1026, %v1021, %v1023
      %v1028 = vsel %vm1026, %v1023, %v1025
      %1032 = vst [vmem:[#allocation2 + $0x18] sm:$0xf8] %v1027
      %1033 = vst [vmem:[#allocation2 + $0x20] sm:$0xf8] %v1028
      %1034 = vst.msk [vmem:[#allocation2 + $0x28] sm:$0xf8] %vm665, %v1025
      %v1035 = vld [vmem:[#allocation4] sm:$0x1f]
      %v1036 = vld [vmem:[#allocation4 + $0x8] sm:$0x1f]
      %v1037 = vld [vmem:[#allocation4 + $0x10] sm:$0x1f]
      %1041 = vrot.lane.b32.xlu0 %v1035, 106
      %v1042 = vpop.permute.xlu0 %1041
      %1043 = vrot.lane.b32.xlu0 %v1036, 106
      %v1044 = vpop.permute.xlu0 %1043
      %1045 = vrot.lane.b32.xlu0 %v1037, 106
      %v1046 = vpop.permute.xlu0 %1045
      %vm1047 = vcmask 867328
      %v1048 = vsel %vm1047, %v1042, %v1044
      %v1049 = vsel %vm1047, %v1044, %v1046
      %1053 = vst [vmem:[#allocation2 + $0x30] sm:$0x1f] %v1048
      %1054 = vst [vmem:[#allocation2 + $0x38] sm:$0x1f] %v1049
      %1055 = vst.msk [vmem:[#allocation2 + $0x40] sm:$0x1f] %vm686, %v1046
      %v1056 = vld [vmem:[#allocation4] sm:$0x1f]
      %v1057 = vld [vmem:[#allocation4 + $0x8] sm:$0x1f]
      %v1058 = vld [vmem:[#allocation4 + $0x10] sm:$0x1f]
      %v1062 = vrot.slane %v1056, 3
      %v1063 = vrot.slane %v1057, 3
      %v1064 = vrot.slane %v1058, 3
      %1065 = vrot.lane.b32.xlu0 %v1062, 105
      %v1066 = vpop.permute.xlu0 %1065
      %1067 = vrot.lane.b32.xlu0 %v1063, 105
      %v1068 = vpop.permute.xlu0 %1067
      %1069 = vrot.lane.b32.xlu0 %v1064, 105
      %v1070 = vpop.permute.xlu0 %1069
      %vm1071 = vcmask 859136
      %v1072 = vsel %vm1071, %v1066, %v1068
      %v1073 = vsel %vm1071, %v1068, %v1070
      %1077 = vst [vmem:[#allocation2 + $0x30] sm:$0xe0] %v1072
      %1078 = vst [vmem:[#allocation2 + $0x38] sm:$0xe0] %v1073
      %1079 = vst.msk [vmem:[#allocation2 + $0x40] sm:$0xe0] %vm345, %v1070
      %1080 = vst [vmem:[#allocation2 + $0x48] sm:$0x3] %v1072
      %1081 = vst [vmem:[#allocation2 + $0x50] sm:$0x3] %v1073
      %1082 = vst.msk [vmem:[#allocation2 + $0x58] sm:$0x3] %vm297, %v1070
      %v1083 = vld [vmem:[#allocation4] sm:$0x1f]
      %v1084 = vld [vmem:[#allocation4 + $0x8] sm:$0x1f]
      %v1085 = vld [vmem:[#allocation4 + $0x10] sm:$0x1f]
      %v1089 = vrot.slane %v1083, 6
      %v1090 = vrot.slane %v1084, 6
      %v1091 = vrot.slane %v1085, 6
      %1092 = vrot.lane.b32.xlu0 %v1089, 91
      %v1093 = vpop.permute.xlu0 %1092
      %1094 = vrot.lane.b32.xlu0 %v1090, 91
      %v1095 = vpop.permute.xlu0 %1094
      %1096 = vrot.lane.b32.xlu0 %v1091, 91
      %v1097 = vpop.permute.xlu0 %1096
      %v1098 = vsel %vm406, %v1093, %v1095
      %v1099 = vsel %vm406, %v1095, %v1097
      %1103 = vst [vmem:[#allocation2 + $0x48] sm:$0x7c] %v1098
      %1104 = vst [vmem:[#allocation2 + $0x50] sm:$0x7c] %v1099
      %1105 = vst.msk [vmem:[#allocation2 + $0x58] sm:$0x7c] %vm736, %v1097
      %v1106 = vld [vmem:[#allocation4] sm:$0x1f]
      %v1107 = vld [vmem:[#allocation4 + $0x8] sm:$0x1f]
      %v1108 = vld [vmem:[#allocation4 + $0x10] sm:$0x1f]
      %v1112 = vrot.slane %v1106, 1
      %v1113 = vrot.slane %v1107, 1
      %v1114 = vrot.slane %v1108, 1
      %1115 = vrot.lane.b32.xlu0 %v1112, 90
      %v1116 = vpop.permute.xlu0 %1115
      %1117 = vrot.lane.b32.xlu0 %v1113, 90
      %v1118 = vpop.permute.xlu0 %1117
      %1119 = vrot.lane.b32.xlu0 %v1114, 90
      %v1120 = vpop.permute.xlu0 %1119
      %v1121 = vsel %vm434, %v1116, %v1118
      %v1122 = vsel %vm434, %v1118, %v1120
      %1126 = vst [vmem:[#allocation2 + $0x48] sm:$0x80] %v1121
      %1127 = vst [vmem:[#allocation2 + $0x50] sm:$0x80] %v1122
      %1128 = vst.msk [vmem:[#allocation2 + $0x58] sm:$0x80] %vm293, %v1120
      %1129 = vst [vmem:[#allocation2 + $0x60] sm:$0xf] %v1121
      %1130 = vst [vmem:[#allocation2 + $0x68] sm:$0xf] %v1122
      %1131 = vst.msk [vmem:[#allocation2 + $0x70] sm:$0xf] %vm763, %v1120
      %v1132 = vld [vmem:[#allocation4] sm:$0x1f]
      %v1133 = vld [vmem:[#allocation4 + $0x8] sm:$0x1f]
      %v1134 = vld [vmem:[#allocation4 + $0x10] sm:$0x1f]
      %v1138 = vrot.slane %v1132, 4
      %v1139 = vrot.slane %v1133, 4
      %v1140 = vrot.slane %v1134, 4
      %1141 = vrot.lane.b32.xlu0 %v1138, 89
      %v1142 = vpop.permute.xlu0 %1141
      %1143 = vrot.lane.b32.xlu0 %v1139, 89
      %v1144 = vpop.permute.xlu0 %1143
      %1145 = vrot.lane.b32.xlu0 %v1140, 89
      %v1146 = vpop.permute.xlu0 %1145
      %vm1147 = vcmask 728064
      %v1148 = vsel %vm1147, %v1142, %v1144
      %v1149 = vsel %vm1147, %v1144, %v1146
      %1153 = vst [vmem:[#allocation2 + $0x60] sm:$0xf0] %v1148
      %1154 = vst [vmem:[#allocation2 + $0x68] sm:$0xf0] %v1149
      %1155 = vst.msk [vmem:[#allocation2 + $0x70] sm:$0xf0] %vm787, %v1146
      %1156 = vst [vmem:[#allocation2 + $0x78] sm:$0x1] %v1148
      %1157 = vst [vmem:[#allocation2 + $0x80] sm:$0x1] %v1149
      %1158 = vst.msk [vmem:[#allocation2 + $0x88] sm:$0x1] %vm418, %v1146
      %v1159 = vld [vmem:[#allocation4] sm:$0x1f]
      %v1160 = vld [vmem:[#allocation4 + $0x8] sm:$0x1f]
      %v1161 = vld [vmem:[#allocation4 + $0x10] sm:$0x1f]
      %v1165 = vrot.slane %v1159, 7
      %v1166 = vrot.slane %v1160, 7
      %v1167 = vrot.slane %v1161, 7
      %1168 = vrot.lane.b32.xlu0 %v1165, 88
      %v1169 = vpop.permute.xlu0 %1168
      %1170 = vrot.lane.b32.xlu0 %v1166, 88
      %v1171 = vpop.permute.xlu0 %1170
      %1172 = vrot.lane.b32.xlu0 %v1167, 88
      %v1173 = vpop.permute.xlu0 %1172
      %vm1174 = vcmask 719872
      %v1175 = vsel %vm1174, %v1169, %v1171
      %v1176 = vsel %vm1174, %v1171, %v1173
      %1180 = vst [vmem:[#allocation2 + $0x78] sm:$0x3e] %v1175
      %1181 = vst [vmem:[#allocation2 + $0x80] sm:$0x3e] %v1176
      %1182 = vst.msk [vmem:[#allocation2 + $0x88] sm:$0x3e] %vm615, %v1173
      %v1183 = vld [vmem:[#allocation4] sm:$0x1f]
      %v1184 = vld [vmem:[#allocation4 + $0x8] sm:$0x1f]
      %v1185 = vld [vmem:[#allocation4 + $0x10] sm:$0x1f]
      %v1189 = vrot.slane %v1183, 2
      %v1190 = vrot.slane %v1184, 2
      %v1191 = vrot.slane %v1185, 2
      %1192 = vrot.lane.b32.xlu0 %v1189, 87
      %v1193 = vpop.permute.xlu0 %1192
      %1194 = vrot.lane.b32.xlu0 %v1190, 87
      %v1195 = vpop.permute.xlu0 %1194
      %1196 = vrot.lane.b32.xlu0 %v1191, 87
      %v1197 = vpop.permute.xlu0 %1196
      %vm1198 = vcmask 711680
      %v1199 = vsel %vm1198, %v1193, %v1195
      %v1200 = vsel %vm1198, %v1195, %v1197
      %1204 = vst [vmem:[#allocation2 + $0x78] sm:$0xc0] %v1199
      %1205 = vst [vmem:[#allocation2 + $0x80] sm:$0xc0] %v1200
      %1206 = vst.msk [vmem:[#allocation2 + $0x88] sm:$0xc0] %vm414, %v1197
      %1207 = vst [vmem:[#allocation2 + $0x90] sm:$0x7] %v1199
      %1208 = vst [vmem:[#allocation2 + $0x98] sm:$0x7] %v1200
      %1209 = vst.msk [vmem:[#allocation2 + $0xa0] sm:$0x7] %vm366, %v1197
      %v1210 = vld [vmem:[#allocation4] sm:$0x1f]
      %v1211 = vld [vmem:[#allocation4 + $0x8] sm:$0x1f]
      %v1212 = vld [vmem:[#allocation4 + $0x10] sm:$0x1f]
      %v1216 = vrot.slane %v1210, 5
      %v1217 = vrot.slane %v1211, 5
      %v1218 = vrot.slane %v1212, 5
      %1219 = vrot.lane.b32.xlu0 %v1216, 73
      %v1220 = vpop.permute.xlu0 %1219
      %1221 = vrot.lane.b32.xlu0 %v1217, 73
      %v1222 = vpop.permute.xlu0 %1221
      %1223 = vrot.lane.b32.xlu0 %v1218, 73
      %v1224 = vpop.permute.xlu0 %1223
      %vm1225 = vcmask 596992
      %v1226 = vsel %vm1225, %v1220, %v1222
      %v1227 = vsel %vm1225, %v1222, %v1224
      %1231 = vst [vmem:[#allocation2 + $0x90] sm:$0xf8] %v1226
      %1232 = vst [vmem:[#allocation2 + $0x98] sm:$0xf8] %v1227
      %1233 = vst.msk [vmem:[#allocation2 + $0xa0] sm:$0xf8] %vm665, %v1224
      %v1234 = vld [vmem:[#allocation4] sm:$0x1f]
      %v1235 = vld [vmem:[#allocation4 + $0x8] sm:$0x1f]
      %v1236 = vld [vmem:[#allocation4 + $0x10] sm:$0x1f]
      %1240 = vrot.lane.b32.xlu0 %v1234, 72
      %v1241 = vpop.permute.xlu0 %1240
      %1242 = vrot.lane.b32.xlu0 %v1235, 72
      %v1243 = vpop.permute.xlu0 %1242
      %1244 = vrot.lane.b32.xlu0 %v1236, 72
      %v1245 = vpop.permute.xlu0 %1244
      %vm1246 = vcmask 588800
      %v1247 = vsel %vm1246, %v1241, %v1243
      %v1248 = vsel %vm1246, %v1243, %v1245
      %1252 = vst [vmem:[#allocation2 + $0xa8] sm:$0x1f] %v1247
      %1253 = vst [vmem:[#allocation2 + $0xb0] sm:$0x1f] %v1248
      %1254 = vst.msk [vmem:[#allocation2 + $0xb8] sm:$0x1f] %vm686, %v1245
      %v1255 = vld [vmem:[#allocation4] sm:$0x1f]
      %v1256 = vld [vmem:[#allocation4 + $0x8] sm:$0x1f]
      %v1257 = vld [vmem:[#allocation4 + $0x10] sm:$0x1f]
      %v1261 = vrot.slane %v1255, 3
      %v1262 = vrot.slane %v1256, 3
      %v1263 = vrot.slane %v1257, 3
      %1264 = vrot.lane.b32.xlu0 %v1261, 71
      %v1265 = vpop.permute.xlu0 %1264
      %1266 = vrot.lane.b32.xlu0 %v1262, 71
      %v1267 = vpop.permute.xlu0 %1266
      %1268 = vrot.lane.b32.xlu0 %v1263, 71
      %v1269 = vpop.permute.xlu0 %1268
      %vm1270 = vcmask 580608
      %v1271 = vsel %vm1270, %v1265, %v1267
      %v1272 = vsel %vm1270, %v1267, %v1269
      %1276 = vst [vmem:[#allocation2 + $0xa8] sm:$0xe0] %v1271
      %1277 = vst [vmem:[#allocation2 + $0xb0] sm:$0xe0] %v1272
      %1278 = vst.msk [vmem:[#allocation2 + $0xb8] sm:$0xe0] %vm345, %v1269
      %1279 = vst [vmem:[#allocation2 + $0xc0] sm:$0x3] %v1271
      %1280 = vst [vmem:[#allocation2 + $0xc8] sm:$0x3] %v1272
      %1281 = vst.msk [vmem:[#allocation2 + $0xd0] sm:$0x3] %vm297, %v1269
      %v1282 = vld [vmem:[#allocation4] sm:$0x1f]
      %v1283 = vld [vmem:[#allocation4 + $0x8] sm:$0x1f]
      %v1284 = vld [vmem:[#allocation4 + $0x10] sm:$0x1f]
      %v1288 = vrot.slane %v1282, 6
      %v1289 = vrot.slane %v1283, 6
      %v1290 = vrot.slane %v1284, 6
      %1291 = vrot.lane.b32.xlu0 %v1288, 70
      %v1292 = vpop.permute.xlu0 %1291
      %1293 = vrot.lane.b32.xlu0 %v1289, 70
      %v1294 = vpop.permute.xlu0 %1293
      %1295 = vrot.lane.b32.xlu0 %v1290, 70
      %v1296 = vpop.permute.xlu0 %1295
      %vm1297 = vcmask 572416
      %v1298 = vsel %vm1297, %v1292, %v1294
      %v1299 = vsel %vm1297, %v1294, %v1296
      %1303 = vst [vmem:[#allocation2 + $0xc0] sm:$0x7c] %v1298
      %1304 = vst [vmem:[#allocation2 + $0xc8] sm:$0x7c] %v1299
      %1305 = vst.msk [vmem:[#allocation2 + $0xd0] sm:$0x7c] %vm736, %v1296
      %v1306 = vld [vmem:[#allocation4] sm:$0x1f]
      %v1307 = vld [vmem:[#allocation4 + $0x8] sm:$0x1f]
      %v1308 = vld [vmem:[#allocation4 + $0x10] sm:$0x1f]
      %v1312 = vrot.slane %v1306, 1
      %v1313 = vrot.slane %v1307, 1
      %v1314 = vrot.slane %v1308, 1
      %1315 = vrot.lane.b32.xlu0 %v1312, 69
      %v1316 = vpop.permute.xlu0 %1315
      %1317 = vrot.lane.b32.xlu0 %v1313, 69
      %v1318 = vpop.permute.xlu0 %1317
      %1319 = vrot.lane.b32.xlu0 %v1314, 69
      %v1320 = vpop.permute.xlu0 %1319
      %vm1321 = vcmask 564224
      %v1322 = vsel %vm1321, %v1316, %v1318
      %v1323 = vsel %vm1321, %v1318, %v1320
      %1327 = vst [vmem:[#allocation2 + $0xc0] sm:$0x80] %v1322
      %1328 = vst [vmem:[#allocation2 + $0xc8] sm:$0x80] %v1323
      %1329 = vst.msk [vmem:[#allocation2 + $0xd0] sm:$0x80] %vm293, %v1320
      %1330 = vst [vmem:[#allocation2 + $0xd8] sm:$0xf] %v1322
      %1331 = vst [vmem:[#allocation2 + $0xe0] sm:$0xf] %v1323
      %1332 = vst.msk [vmem:[#allocation2 + $0xe8] sm:$0xf] %vm763, %v1320
      %v1333 = vld [vmem:[#allocation4] sm:$0x1f]
      %v1334 = vld [vmem:[#allocation4 + $0x8] sm:$0x1f]
      %v1335 = vld [vmem:[#allocation4 + $0x10] sm:$0x1f]
      %v1336 = vld [vmem:[#allocation4 + $0x18] sm:$0x1f]
      %v1341 = vrot.slane %v1333, 4
      %v1342 = vrot.slane %v1334, 4
      %v1343 = vrot.slane %v1335, 4
      %v1344 = vrot.slane %v1336, 4
      %1345 = vrot.lane.b32.xlu0 %v1341, 55
      %v1346 = vpop.permute.xlu0 %1345
      %1347 = vrot.lane.b32.xlu0 %v1342, 55
      %v1348 = vpop.permute.xlu0 %1347
      %1349 = vrot.lane.b32.xlu0 %v1343, 55
      %v1350 = vpop.permute.xlu0 %1349
      %1351 = vrot.lane.b32.xlu0 %v1344, 55
      %v1352 = vpop.permute.xlu0 %1351
      %vm1353 = vcmask 449536
      %v1354 = vsel %vm1353, %v1346, %v1348
      %v1355 = vsel %vm1353, %v1348, %v1350
      %v1356 = vsel %vm1353, %v1350, %v1352
      %1360 = vst [vmem:[#allocation2 + $0xd8] sm:$0xf0] %v1354
      %1361 = vst [vmem:[#allocation2 + $0xe0] sm:$0xf0] %v1355
      %1362 = vst.msk [vmem:[#allocation2 + $0xe8] sm:$0xf0] %vm787, %v1356
      %1363 = vst [vmem:[#allocation2 + $0xf0] sm:$0x1] %v1354
      %1364 = vst [vmem:[#allocation2 + $0xf8] sm:$0x1] %v1355
      %1365 = vst.msk [vmem:[#allocation2 + $0x100] sm:$0x1] %vm418, %v1356
      %v1366 = vld [vmem:[#allocation4] sm:$0x1f]
      %v1367 = vld [vmem:[#allocation4 + $0x8] sm:$0x1f]
      %v1368 = vld [vmem:[#allocation4 + $0x10] sm:$0x1f]
      %v1369 = vld [vmem:[#allocation4 + $0x18] sm:$0x1f]
      %v1374 = vrot.slane %v1366, 7
      %v1375 = vrot.slane %v1367, 7
      %v1376 = vrot.slane %v1368, 7
      %v1377 = vrot.slane %v1369, 7
      %1378 = vrot.lane.b32.xlu0 %v1374, 54
      %v1379 = vpop.permute.xlu0 %1378
      %1380 = vrot.lane.b32.xlu0 %v1375, 54
      %v1381 = vpop.permute.xlu0 %1380
      %1382 = vrot.lane.b32.xlu0 %v1376, 54
      %v1383 = vpop.permute.xlu0 %1382
      %1384 = vrot.lane.b32.xlu0 %v1377, 54
      %v1385 = vpop.permute.xlu0 %1384
      %vm1386 = vcmask 441344
      %v1387 = vsel %vm1386, %v1379, %v1381
      %v1388 = vsel %vm1386, %v1381, %v1383
      %v1389 = vsel %vm1386, %v1383, %v1385
      %1393 = vst [vmem:[#allocation2 + $0xf0] sm:$0x3e] %v1387
      %1394 = vst [vmem:[#allocation2 + $0xf8] sm:$0x3e] %v1388
      %1395 = vst.msk [vmem:[#allocation2 + $0x100] sm:$0x3e] %vm615, %v1389
      %v1396 = vld [vmem:[#allocation4] sm:$0x1f]
      %v1397 = vld [vmem:[#allocation4 + $0x8] sm:$0x1f]
      %v1398 = vld [vmem:[#allocation4 + $0x10] sm:$0x1f]
      %v1399 = vld [vmem:[#allocation4 + $0x18] sm:$0x1f]
      %v1404 = vrot.slane %v1396, 2
      %v1405 = vrot.slane %v1397, 2
      %v1406 = vrot.slane %v1398, 2
      %v1407 = vrot.slane %v1399, 2
      %1408 = vrot.lane.b32.xlu0 %v1404, 53
      %v1409 = vpop.permute.xlu0 %1408
      %1410 = vrot.lane.b32.xlu0 %v1405, 53
      %v1411 = vpop.permute.xlu0 %1410
      %1412 = vrot.lane.b32.xlu0 %v1406, 53
      %v1413 = vpop.permute.xlu0 %1412
      %1414 = vrot.lane.b32.xlu0 %v1407, 53
      %v1415 = vpop.permute.xlu0 %1414
      %vm1416 = vcmask 433152
      %v1417 = vsel %vm1416, %v1409, %v1411
      %v1418 = vsel %vm1416, %v1411, %v1413
      %v1419 = vsel %vm1416, %v1413, %v1415
      %1423 = vst [vmem:[#allocation2 + $0xf0] sm:$0xc0] %v1417
      %1424 = vst [vmem:[#allocation2 + $0xf8] sm:$0xc0] %v1418
      %1425 = vst.msk [vmem:[#allocation2 + $0x100] sm:$0xc0] %vm414, %v1419
      %1426 = vst [vmem:[#allocation2 + $0x108] sm:$0x7] %v1417
      %1427 = vst [vmem:[#allocation2 + $0x110] sm:$0x7] %v1418
      %1428 = vst.msk [vmem:[#allocation2 + $0x118] sm:$0x7] %vm366, %v1419
      %v1429 = vld [vmem:[#allocation4] sm:$0x1f]
      %v1430 = vld [vmem:[#allocation4 + $0x8] sm:$0x1f]
      %v1431 = vld [vmem:[#allocation4 + $0x10] sm:$0x1f]
      %v1432 = vld [vmem:[#allocation4 + $0x18] sm:$0x1f]
      %v1437 = vrot.slane %v1429, 5
      %v1438 = vrot.slane %v1430, 5
      %v1439 = vrot.slane %v1431, 5
      %v1440 = vrot.slane %v1432, 5
      %1441 = vrot.lane.b32.xlu0 %v1437, 52
      %v1442 = vpop.permute.xlu0 %1441
      %1443 = vrot.lane.b32.xlu0 %v1438, 52
      %v1444 = vpop.permute.xlu0 %1443
      %1445 = vrot.lane.b32.xlu0 %v1439, 52
      %v1446 = vpop.permute.xlu0 %1445
      %1447 = vrot.lane.b32.xlu0 %v1440, 52
      %v1448 = vpop.permute.xlu0 %1447
      %vm1449 = vcmask 424960
      %v1450 = vsel %vm1449, %v1442, %v1444
      %v1451 = vsel %vm1449, %v1444, %v1446
      %v1452 = vsel %vm1449, %v1446, %v1448
      %1456 = vst [vmem:[#allocation2 + $0x108] sm:$0xf8] %v1450
      %1457 = vst [vmem:[#allocation2 + $0x110] sm:$0xf8] %v1451
      %1458 = vst.msk [vmem:[#allocation2 + $0x118] sm:$0xf8] %vm665, %v1452
      %v1459 = vld [vmem:[#allocation4] sm:$0x1f]
      %v1460 = vld [vmem:[#allocation4 + $0x8] sm:$0x1f]
      %v1461 = vld [vmem:[#allocation4 + $0x10] sm:$0x1f]
      %v1462 = vld [vmem:[#allocation4 + $0x18] sm:$0x1f]
      %1467 = vrot.lane.b32.xlu0 %v1459, 51
      %v1468 = vpop.permute.xlu0 %1467
      %1469 = vrot.lane.b32.xlu0 %v1460, 51
      %v1470 = vpop.permute.xlu0 %1469
      %1471 = vrot.lane.b32.xlu0 %v1461, 51
      %v1472 = vpop.permute.xlu0 %1471
      %1473 = vrot.lane.b32.xlu0 %v1462, 51
      %v1474 = vpop.permute.xlu0 %1473
      %vm1475 = vcmask 416768
      %v1476 = vsel %vm1475, %v1468, %v1470
      %v1477 = vsel %vm1475, %v1470, %v1472
      %v1478 = vsel %vm1475, %v1472, %v1474
      %1482 = vst [vmem:[#allocation2 + $0x120] sm:$0x1f] %v1476
      %1483 = vst [vmem:[#allocation2 + $0x128] sm:$0x1f] %v1477
      %1484 = vst.msk [vmem:[#allocation2 + $0x130] sm:$0x1f] %vm686, %v1478
      %v1485 = vld [vmem:[#allocation4] sm:$0x1f]
      %v1486 = vld [vmem:[#allocation4 + $0x8] sm:$0x1f]
      %v1487 = vld [vmem:[#allocation4 + $0x10] sm:$0x1f]
      %v1488 = vld [vmem:[#allocation4 + $0x18] sm:$0x1f]
      %v1493 = vrot.slane %v1485, 3
      %v1494 = vrot.slane %v1486, 3
      %v1495 = vrot.slane %v1487, 3
      %v1496 = vrot.slane %v1488, 3
      %1497 = vrot.lane.b32.xlu0 %v1493, 37
      %v1498 = vpop.permute.xlu0 %1497
      %1499 = vrot.lane.b32.xlu0 %v1494, 37
      %v1500 = vpop.permute.xlu0 %1499
      %1501 = vrot.lane.b32.xlu0 %v1495, 37
      %v1502 = vpop.permute.xlu0 %1501
      %1503 = vrot.lane.b32.xlu0 %v1496, 37
      %v1504 = vpop.permute.xlu0 %1503
      %vm1505 = vcmask 302080
      %v1506 = vsel %vm1505, %v1498, %v1500
      %v1507 = vsel %vm1505, %v1500, %v1502
      %v1508 = vsel %vm1505, %v1502, %v1504
      %1512 = vst [vmem:[#allocation2 + $0x120] sm:$0xe0] %v1506
      %1513 = vst [vmem:[#allocation2 + $0x128] sm:$0xe0] %v1507
      %1514 = vst.msk [vmem:[#allocation2 + $0x130] sm:$0xe0] %vm345, %v1508
      %1515 = vst [vmem:[#allocation2 + $0x138] sm:$0x3] %v1506
      %1516 = vst [vmem:[#allocation2 + $0x140] sm:$0x3] %v1507
      %1517 = vst.msk [vmem:[#allocation2 + $0x148] sm:$0x3] %vm297, %v1508
      %v1518 = vld [vmem:[#allocation4] sm:$0x1f]
      %v1519 = vld [vmem:[#allocation4 + $0x8] sm:$0x1f]
      %v1520 = vld [vmem:[#allocation4 + $0x10] sm:$0x1f]
      %v1521 = vld [vmem:[#allocation4 + $0x18] sm:$0x1f]
      %v1526 = vrot.slane %v1518, 6
      %v1527 = vrot.slane %v1519, 6
      %v1528 = vrot.slane %v1520, 6
      %v1529 = vrot.slane %v1521, 6
      %1530 = vrot.lane.b32.xlu0 %v1526, 36
      %v1531 = vpop.permute.xlu0 %1530
      %1532 = vrot.lane.b32.xlu0 %v1527, 36
      %v1533 = vpop.permute.xlu0 %1532
      %1534 = vrot.lane.b32.xlu0 %v1528, 36
      %v1535 = vpop.permute.xlu0 %1534
      %1536 = vrot.lane.b32.xlu0 %v1529, 36
      %v1537 = vpop.permute.xlu0 %1536
      %vm1538 = vcmask 293888
      %v1539 = vsel %vm1538, %v1531, %v1533
      %v1540 = vsel %vm1538, %v1533, %v1535
      %v1541 = vsel %vm1538, %v1535, %v1537
      %1545 = vst [vmem:[#allocation2 + $0x138] sm:$0x7c] %v1539
      %1546 = vst [vmem:[#allocation2 + $0x140] sm:$0x7c] %v1540
      %1547 = vst.msk [vmem:[#allocation2 + $0x148] sm:$0x7c] %vm736, %v1541
      %v1548 = vld [vmem:[#allocation4] sm:$0x1f]
      %v1549 = vld [vmem:[#allocation4 + $0x8] sm:$0x1f]
      %v1550 = vld [vmem:[#allocation4 + $0x10] sm:$0x1f]
      %v1551 = vld [vmem:[#allocation4 + $0x18] sm:$0x1f]
      %v1556 = vrot.slane %v1548, 1
      %v1557 = vrot.slane %v1549, 1
      %v1558 = vrot.slane %v1550, 1
      %v1559 = vrot.slane %v1551, 1
      %1560 = vrot.lane.b32.xlu0 %v1556, 35
      %v1561 = vpop.permute.xlu0 %1560
      %1562 = vrot.lane.b32.xlu0 %v1557, 35
      %v1563 = vpop.permute.xlu0 %1562
      %1564 = vrot.lane.b32.xlu0 %v1558, 35
      %v1565 = vpop.permute.xlu0 %1564
      %1566 = vrot.lane.b32.xlu0 %v1559, 35
      %v1567 = vpop.permute.xlu0 %1566
      %vm1568 = vcmask 285696
      %v1569 = vsel %vm1568, %v1561, %v1563
      %v1570 = vsel %vm1568, %v1563, %v1565
      %v1571 = vsel %vm1568, %v1565, %v1567
      %1575 = vst [vmem:[#allocation2 + $0x138] sm:$0x80] %v1569
      %1576 = vst [vmem:[#allocation2 + $0x140] sm:$0x80] %v1570
      %1577 = vst.msk [vmem:[#allocation2 + $0x148] sm:$0x80] %vm293, %v1571
      %1578 = vst [vmem:[#allocation2 + $0x150] sm:$0xf] %v1569
      %1579 = vst [vmem:[#allocation2 + $0x158] sm:$0xf] %v1570
      %1580 = vst.msk [vmem:[#allocation2 + $0x160] sm:$0xf] %vm763, %v1571
      %v1581 = vld [vmem:[#allocation4] sm:$0x1f]
      %v1582 = vld [vmem:[#allocation4 + $0x8] sm:$0x1f]
      %v1583 = vld [vmem:[#allocation4 + $0x10] sm:$0x1f]
      %v1584 = vld [vmem:[#allocation4 + $0x18] sm:$0x1f]
      %v1589 = vrot.slane %v1581, 4
      %v1590 = vrot.slane %v1582, 4
      %v1591 = vrot.slane %v1583, 4
      %v1592 = vrot.slane %v1584, 4
      %1593 = vrot.lane.b32.xlu0 %v1589, 34
      %v1594 = vpop.permute.xlu0 %1593
      %1595 = vrot.lane.b32.xlu0 %v1590, 34
      %v1596 = vpop.permute.xlu0 %1595
      %1597 = vrot.lane.b32.xlu0 %v1591, 34
      %v1598 = vpop.permute.xlu0 %1597
      %1599 = vrot.lane.b32.xlu0 %v1592, 34
      %v1600 = vpop.permute.xlu0 %1599
      %vm1601 = vcmask 277504
      %v1602 = vsel %vm1601, %v1594, %v1596
      %v1603 = vsel %vm1601, %v1596, %v1598
      %v1604 = vsel %vm1601, %v1598, %v1600
      %1608 = vst [vmem:[#allocation2 + $0x150] sm:$0xf0] %v1602
      %1609 = vst [vmem:[#allocation2 + $0x158] sm:$0xf0] %v1603
      %1610 = vst.msk [vmem:[#allocation2 + $0x160] sm:$0xf0] %vm787, %v1604
      %1611 = vst [vmem:[#allocation2 + $0x168] sm:$0x1] %v1602
      %1612 = vst [vmem:[#allocation2 + $0x170] sm:$0x1] %v1603
      %1613 = vst.msk [vmem:[#allocation2 + $0x178] sm:$0x1] %vm418, %v1604
      %v1614 = vld [vmem:[#allocation4] sm:$0x1f]
      %v1615 = vld [vmem:[#allocation4 + $0x8] sm:$0x1f]
      %v1616 = vld [vmem:[#allocation4 + $0x10] sm:$0x1f]
      %v1617 = vld [vmem:[#allocation4 + $0x18] sm:$0x1f]
      %v1622 = vrot.slane %v1614, 7
      %v1623 = vrot.slane %v1615, 7
      %v1624 = vrot.slane %v1616, 7
      %v1625 = vrot.slane %v1617, 7
      %1626 = vrot.lane.b32.xlu0 %v1622, 33
      %v1627 = vpop.permute.xlu0 %1626
      %1628 = vrot.lane.b32.xlu0 %v1623, 33
      %v1629 = vpop.permute.xlu0 %1628
      %1630 = vrot.lane.b32.xlu0 %v1624, 33
      %v1631 = vpop.permute.xlu0 %1630
      %1632 = vrot.lane.b32.xlu0 %v1625, 33
      %v1633 = vpop.permute.xlu0 %1632
      %vm1634 = vcmask 269312
      %v1635 = vsel %vm1634, %v1627, %v1629
      %v1636 = vsel %vm1634, %v1629, %v1631
      %v1637 = vsel %vm1634, %v1631, %v1633
      %1641 = vst [vmem:[#allocation2 + $0x168] sm:$0x3e] %v1635
      %1642 = vst [vmem:[#allocation2 + $0x170] sm:$0x3e] %v1636
      %1643 = vst.msk [vmem:[#allocation2 + $0x178] sm:$0x3e] %vm615, %v1637
      %v1644 = vld [vmem:[%s3] sm:$0x7]
      %v1645 = vld [vmem:[#allocation2] sm:$0xff]
      %v1646 = vld [vmem:[#allocation2 + $0x8] sm:$0xff]
      %v1647 = vld [vmem:[#allocation2 + $0x10] sm:$0xff]
      %v1648 = vld [vmem:[#allocation2 + $0x18] sm:$0xff]
      %v1649 = vld [vmem:[#allocation2 + $0x20] sm:$0xff]
      %v1650 = vld [vmem:[#allocation2 + $0x28] sm:$0xff]
      %v1651 = vld [vmem:[#allocation2 + $0x30] sm:$0xff]
      %v1652 = vld [vmem:[#allocation2 + $0x38] sm:$0xff]
      %v1653 = vld [vmem:[#allocation2 + $0x40] sm:$0xff]
      %v1654 = vld [vmem:[#allocation2 + $0x48] sm:$0xff]
      %v1655 = vld [vmem:[#allocation2 + $0x50] sm:$0xff]
      %v1656 = vld [vmem:[#allocation2 + $0x58] sm:$0xff]
      %v1657 = vld [vmem:[#allocation2 + $0x60] sm:$0xff]
      %v1658 = vld [vmem:[#allocation2 + $0x68] sm:$0xff]
      %v1659 = vld [vmem:[#allocation2 + $0x70] sm:$0xff]
      %v1660 = vld [vmem:[#allocation2 + $0x78] sm:$0xff]
      %v1661 = vld [vmem:[#allocation2 + $0x80] sm:$0xff]
      %v1662 = vld [vmem:[#allocation2 + $0x88] sm:$0xff]
      %v1663 = vld [vmem:[#allocation2 + $0x90] sm:$0xff]
      %v1664 = vld [vmem:[#allocation2 + $0x98] sm:$0xff]
      %v1665 = vld [vmem:[#allocation2 + $0xa0] sm:$0xff]
      %v1666 = vld [vmem:[#allocation2 + $0xa8] sm:$0xff]
      %v1667 = vld [vmem:[#allocation2 + $0xb0] sm:$0xff]
      %v1668 = vld [vmem:[#allocation2 + $0xb8] sm:$0xff]
      %v1669 = vld [vmem:[#allocation2 + $0xc0] sm:$0xff]
      %v1670 = vld [vmem:[#allocation2 + $0xc8] sm:$0xff]
      %v1671 = vld [vmem:[#allocation2 + $0xd0] sm:$0xff]
      %v1672 = vld [vmem:[#allocation2 + $0xd8] sm:$0xff]
      %v1673 = vld [vmem:[#allocation2 + $0xe0] sm:$0xff]
      %v1674 = vld [vmem:[#allocation2 + $0xe8] sm:$0xff]
      %v1675 = vld [vmem:[#allocation2 + $0xf0] sm:$0xff]
      %v1676 = vld [vmem:[#allocation2 + $0xf8] sm:$0xff]
      %v1677 = vld [vmem:[#allocation2 + $0x100] sm:$0xff]
      %v1678 = vld [vmem:[#allocation2 + $0x108] sm:$0xff]
      %v1679 = vld [vmem:[#allocation2 + $0x110] sm:$0xff]
      %v1680 = vld [vmem:[#allocation2 + $0x118] sm:$0xff]
      %v1681 = vld [vmem:[#allocation2 + $0x120] sm:$0xff]
      %v1682 = vld [vmem:[#allocation2 + $0x128] sm:$0xff]
      %v1683 = vld [vmem:[#allocation2 + $0x130] sm:$0xff]
      %v1684 = vld [vmem:[#allocation2 + $0x138] sm:$0xff]
      %v1685 = vld [vmem:[#allocation2 + $0x140] sm:$0xff]
      %v1686 = vld [vmem:[#allocation2 + $0x148] sm:$0xff]
      %v1687 = vld [vmem:[#allocation2 + $0x150] sm:$0xff]
      %v1688 = vld [vmem:[#allocation2 + $0x158] sm:$0xff]
      %v1689 = vld [vmem:[#allocation2 + $0x160] sm:$0xff]
      %v1690 = vld [vmem:[#allocation2 + $0x168] sm:$0x3f]
      %v1691 = vld [vmem:[#allocation2 + $0x170] sm:$0x3f]
      %v1692 = vld [vmem:[#allocation2 + $0x178] sm:$0x3f]
      %v1693 = vpack.c.bf16 %v1648, %v1645
      %v1694 = vpack.c.bf16 %v1649, %v1646
      %v1695 = vpack.c.bf16 %v1650, %v1647
      %v1696 = vpack.c.bf16 %v1654, %v1651
      %v1697 = vpack.c.bf16 %v1655, %v1652
      %v1698 = vpack.c.bf16 %v1656, %v1653
      %v1699 = vpack.c.bf16 %v1660, %v1657
      %v1700 = vpack.c.bf16 %v1661, %v1658
      %v1701 = vpack.c.bf16 %v1662, %v1659
      %v1702 = vpack.c.bf16 %v1666, %v1663
      %v1703 = vpack.c.bf16 %v1667, %v1664
      %v1704 = vpack.c.bf16 %v1668, %v1665
      %v1705 = vpack.c.bf16 %v1672, %v1669
      %v1706 = vpack.c.bf16 %v1673, %v1670
      %v1707 = vpack.c.bf16 %v1674, %v1671
      %v1708 = vpack.c.bf16 %v1678, %v1675
      %v1709 = vpack.c.bf16 %v1679, %v1676
      %v1710 = vpack.c.bf16 %v1680, %v1677
      %v1711 = vpack.c.bf16 %v1684, %v1681
      %v1712 = vpack.c.bf16 %v1685, %v1682
      %v1713 = vpack.c.bf16 %v1686, %v1683
      %v1714 = vpack.c.bf16 %v1690, %v1687
      %v1715 = vpack.c.bf16 %v1691, %v1688
      %v1716 = vpack.c.bf16 %v1692, %v1689
      %v1718 = vsel %vm285, %v1644, 0
      %v1721 = vsel %vm847, %v1714, 0
      %v1724 = vsel %vm847, %v1715, 0
      %v1727 = vsel %vm847, %v1716, 0
      %1729 = vmatprep.subr.bf16.mxu0 %v1694
      %1730 = vmatpush1.bf16.msra.mxu0 %v1693
      %1731 = vmatprep.subr.bf16.mxu0 %v1697
      %1732 = vmatpush1.bf16.msra.mxu0 %v1696
      %1733 = vmatprep.subr.bf16.mxu0 %v1700
      %1734 = vmatpush1.bf16.msra.mxu0 %v1699
      %1735 = vmatprep.subr.bf16.mxu0 %v1703
      %1736 = vmatpush1.bf16.msra.mxu0 %v1702
      %1737 = vmatprep.subr.bf16.mxu0 %v1706
      %1738 = vmatpush1.bf16.msra.mxu0 %v1705
      %1739 = vmatprep.subr.bf16.mxu0 %v1709
      %1740 = vmatpush1.bf16.msra.mxu0 %v1708
      %1741 = vmatprep.subr.bf16.mxu0 %v1712
      %1742 = vmatpush1.bf16.msra.mxu0 %v1711
      %1743 = vmatprep.subr.bf16.mxu0 %v1724
      %1744 = vmatpush1.bf16.msra.mxu0 %v1721
      %1745 = vmatprep.subr.bf16.mxu0 0
      %1746 = vmatpush1.bf16.msra.mxu0 0
      %1747 = vmatprep.subr.bf16.mxu0 0
      %1748 = vmatpush1.bf16.msra.mxu0 0
      %1749 = vmatprep.subr.bf16.mxu0 0
      %1750 = vmatpush1.bf16.msra.mxu0 0
      %1751 = vmatprep.subr.bf16.mxu0 0
      %1752 = vmatpush1.bf16.msra.mxu0 0
      %1753 = vmatprep.subr.bf16.mxu0 0
      %1754 = vmatpush1.bf16.msra.mxu0 0
      %1755 = vmatprep.subr.bf16.mxu0 0
      %1756 = vmatpush1.bf16.msra.mxu0 0
      %1757 = vmatprep.subr.bf16.mxu0 0
      %1758 = vmatpush1.bf16.msra.mxu0 0
      %1759 = vmatprep.subr.bf16.mxu0 0
      %1760 = vmatpush1.bf16.msra.mxu0 0
      %1761 = vmatprep.mubr.bf16.mxu0 0
      %1762 = vmatmul.mubr.bf16.gmra.mrb[0].mxu0 %v1718
      %v1763 = vpop.f32.mrb[0].mxu0
      %v1764 = vadd.f32 0.0, %v1763
      %v1765 = vpop.f32.mrb[0].mxu0
      %v1766 = vadd.f32 0.0, %v1765
      %v1767 = vpop.f32.mrb[0].mxu0
      %v1768 = vpop.f32.mrb[0].mxu0
      %1769 = vdwg.mxu0
      %1770 = vmatprep.subr.bf16.mxu0 0
      %1771 = vmatpush1.bf16.msra.mxu0 %v1695
      %1772 = vmatprep.subr.bf16.mxu0 0
      %1773 = vmatpush1.bf16.msra.mxu0 %v1698
      %1774 = vmatprep.subr.bf16.mxu0 0
      %1775 = vmatpush1.bf16.msra.mxu0 %v1701
      %1776 = vmatprep.subr.bf16.mxu0 0
      %1777 = vmatpush1.bf16.msra.mxu0 %v1704
      %1778 = vmatprep.subr.bf16.mxu0 0
      %1779 = vmatpush1.bf16.msra.mxu0 %v1707
      %1780 = vmatprep.subr.bf16.mxu0 0
      %1781 = vmatpush1.bf16.msra.mxu0 %v1710
      %1782 = vmatprep.subr.bf16.mxu0 0
      %1783 = vmatpush1.bf16.msra.mxu0 %v1713
      %1784 = vmatprep.subr.bf16.mxu0 0
      %1785 = vmatpush1.bf16.msra.mxu0 %v1727
      %1786 = vmatprep.subr.bf16.mxu0 0
      %1787 = vmatpush1.bf16.msra.mxu0 0
      %1788 = vmatprep.subr.bf16.mxu0 0
      %1789 = vmatpush1.bf16.msra.mxu0 0
      %1790 = vmatprep.subr.bf16.mxu0 0
      %1791 = vmatpush1.bf16.msra.mxu0 0
      %1792 = vmatprep.subr.bf16.mxu0 0
      %1793 = vmatpush1.bf16.msra.mxu0 0
      %1794 = vmatprep.subr.bf16.mxu0 0
      %1795 = vmatpush1.bf16.msra.mxu0 0
      %1796 = vmatprep.subr.bf16.mxu0 0
      %1797 = vmatpush1.bf16.msra.mxu0 0
      %1798 = vmatprep.subr.bf16.mxu0 0
      %1799 = vmatpush1.bf16.msra.mxu0 0
      %1800 = vmatprep.subr.bf16.mxu0 0
      %1801 = vmatpush1.bf16.msra.mxu0 0
      %1802 = vmatprep.mubr.bf16.mxu0 0
      %1803 = vmatmul.mubr.bf16.gmra.mrb[0].mxu0 %v1718
      %v1804 = vpop.f32.mrb[0].mxu0
      %v1805 = vadd.f32 0.0, %v1804
      %v1806 = vpop.f32.mrb[0].mxu0
      %v1807 = vpop.f32.mrb[0].mxu0
      %v1808 = vpop.f32.mrb[0].mxu0
      %1809 = vdwg.mxu0
      %1810 = vst [vmem:[%s224] sm:$0x1f] %v1764
      %1811 = vst [vmem:[%s224 + $0x8] sm:$0x1f] %v1766
      %1812 = vst.msk [vmem:[%s224 + $0x10] sm:$0x1f] %vm686, %v1805
      %p1813 = scmp.lt.s32.totalorder %s16, 1
      %s1814 = scalar_select %p1813, %s16, 1
      %s1815 = smul.addr %s1814, 3
      %s1816 = smul.addr %s1815, 8
      %s1817 = scalar_lea.vmem %s5, %s1816
      // Predicated region
      $region41: #{res50_forward.1} parent=39 // pred_check
        %p1818 = pneg %p144
      $region42: #{res50_forward.1} parent=39 // pred_check_branch
        %1820 = sbr.rel (%p1818) target = $region44
      $region43: #{res50_forward.1} parent=39 // pred_region
        _
      $region44: #{res50_forward.1} parent=39 // pred_fallthru
        _
    $region40: #{res50_forward.1} parent=5 // pred_fallthru
      _
    %p1821 = scmp.le.s32.totalorder 2, %s11
    // Predicated region
    $region45: #{res50_forward.1} parent=5 // pred_check
      %p1822 = pneg %p1821
    $region46: #{res50_forward.1} parent=5 // pred_check_branch
      %1824 = sbr.rel (%p1822) target = $region48
    $region47: #{res50_forward.1} parent=5 // pred_region
      %s1825 = ssub.s32 %s11, 2
      // Predicated region
      $region49: #{res50_forward.1} parent=47 // pred_check
        %p1826 = pneg %p150
      $region50: #{res50_forward.1} parent=47 // pred_check_branch
        %1828 = sbr.rel (%p1826) target = $region52
      $region51: #{res50_forward.1} parent=47 // pred_region
        %p1829 = scmp.lt.s32.totalorder %s17, 1
        %s1830 = scalar_select %p1829, %s17, 1
        %s1831 = smul.addr %s1830, 3
        %s1832 = smul.addr %s1831, 8
        %s1833 = scalar_lea.vmem %s5, %s1832
      $region52: #{res50_forward.1} parent=47 // pred_fallthru
        _
    $region48: #{res50_forward.1} parent=5 // pred_fallthru
      _
  $region6: #{res50_forward.1} parent=0 // loop_footer
    %s15 = sadd.s32 1, %s11
  $region7: #{res50_forward.1} parent=0 // loop_footer_branch
    %10 = sbr.rel target = $region3
  $region8: #{res50_forward.1} parent=0 // loop_exit
    _

</llo_original>
